<compile_context>
chip_gen: v7x
topology: tpu7x:2x2x1
jax: 0.10.0
libtpu: 0.0.40
codegen_flags: <defaults>
</compile_context>

<pallas_src>
import jax
import jax.numpy as jnp
from jax.experimental import pallas as pl
from jax.experimental.pallas import tpu as pltpu  # noqa: F401  (no grid/tiling needed at these shapes)

# ---- model config (small, consistent with T5Config fields used in __init__) ----
B = 2          # batch
Q = 8          # decoder (query) sequence length
K = 16         # encoder (key/value) sequence length
D_MODEL = 32   # config.d_model
N_HEADS = 4    # config.num_heads
D_KV = 8       # config.d_kv
INNER = N_HEADS * D_KV          # inner_dim == d_model here (32)
EPS = 1e-6                      # config.layer_norm_epsilon


def cross_attn_kernel(hs_ref, kv_ref, ln_ref, a_ref, vo_ref, out_ref):
    """Whole problem in a single invocation (no grid).

    hs_ref : (B*Q, D_MODEL)           decoder hidden states, batch flattened into sublanes
    kv_ref : (B*K, D_MODEL)           encoder states, batch flattened into sublanes
    ln_ref : (1, D_MODEL)             T5LayerNorm weight
    a_ref  : (N_HEADS*D_MODEL, D_MODEL)  row-block h = Wq_h @ Wk_h^T
    vo_ref : (N_HEADS*D_MODEL, D_MODEL)  row-block h = Wv_h @ Wo_h
    out_ref: (B*Q, D_MODEL)
    """
    ln_w = ln_ref[...]                                   # (1, D_MODEL)
    hs = hs_ref[...]                                     # (B*Q, D_MODEL)
    kv = kv_ref[...]                                     # (B*K, D_MODEL)
    a_all = a_ref[...]                                   # (H*D, D)
    vo_all = vo_ref[...]                                 # (H*D, D)

    # --- T5LayerNorm: RMS norm (no mean subtraction), all batch rows at once ---
    var = jnp.mean(hs * hs, axis=-1, keepdims=True)
    norm = hs * jax.lax.rsqrt(var + EPS) * ln_w          # (B*Q, D_MODEL)

    # --- scores for every (batch, head), stacked along sublanes as [b, h, q] rows ---
    score_blocks = []
    for b in range(B):                                   # static, fully unrolled (B=2)
        enc_b = kv[b * K:(b + 1) * K, :]                 # (K, D)   sublane slice (free)
        norm_b = norm[b * Q:(b + 1) * Q, :]              # (Q, D)   sublane slice (free)
        # key-side term for ALL heads in one MXU push:
        #   ae[h*D + d, k] = (Wq_h Wk_h^T enc_b^T)[d, k]
        ae = jax.lax.dot_general(
            a_all, enc_b,
            dimension_numbers=(((1,), (1,)), ((), ())),
            preferred_element_type=jnp.float32)          # (H*D, K)
        for h in range(N_HEADS):                         # static head loop, sublane slices only
            ae_h = ae[h * D_MODEL:(h + 1) * D_MODEL, :]  # (D, K)
            # T5: no 1/sqrt(d_kv) scaling on the scores
            score_blocks.append(
                jnp.dot(norm_b, ae_h, preferred_element_type=jnp.float32))  # (Q, K)
    scores = jnp.concatenate(score_blocks, axis=0)       # (B*H*Q, K)

    # --- one softmax over all (batch, head, query) rows ---
    scores = scores - jnp.max(scores, axis=-1, keepdims=True)
    e = jnp.exp(scores)
    # approx reciprocal -> EUP vrcp slot (near-free); ~1e-3 rel err, tolerance loosened below
    w = e * pl.reciprocal(jnp.sum(e, axis=-1, keepdims=True), approx=True)   # (B*H*Q, K)

    # --- context + fused (V, O) projection, accumulated per batch ---
    y_blocks = []
    for b in range(B):
        enc_b = kv[b * K:(b + 1) * K, :]                 # (K, D)
        w_b = w[b * N_HEADS * Q:(b + 1) * N_HEADS * Q, :]  # (H*Q, K) sublane slice
        # context for ALL heads of this batch in one MXU push: (w_b @ enc_b)
        ctx = jnp.dot(w_b, enc_b, preferred_element_type=jnp.float32)        # (H*Q, D)
        y_b = jnp.zeros((Q, D_MODEL), jnp.float32)
        for h in range(N_HEADS):
            y_b = y_b + jnp.dot(ctx[h * Q:(h + 1) * Q, :],
                                vo_all[h * D_MODEL:(h + 1) * D_MODEL, :],
                                preferred_element_type=jnp.float32)
        y_blocks.append(y_b)
    y = jnp.concatenate(y_blocks, axis=0)                # (B*Q, D_MODEL)

    # residual add (dropout is identity in eval mode); single full-buffer store
    out_ref[...] = hs + y


def amr_t5_layer_cross_attention(hidden_states, kv, ln_w, wq_t, wk_t, wv_t, wo_t):
    """hidden_states: (B, Q, D_MODEL), kv: (B, K, D_MODEL). Returns (B, Q, D_MODEL)."""
    # One-time weight precombination (pure JAX, outside the kernel). Exact reformulation:
    #   q_h k_h^T        = norm Wq_h Wk_h^T enc^T  ->  A_h  = Wq_h @ Wk_h^T   (D, D)
    #   (attn v_h) Wo_h  = attn enc Wv_h Wo_h      ->  VO_h = Wv_h @ Wo_h     (D, D)
    wq3 = wq_t.reshape(D_MODEL, N_HEADS, D_KV)
    wk3 = wk_t.reshape(D_MODEL, N_HEADS, D_KV)
    wv3 = wv_t.reshape(D_MODEL, N_HEADS, D_KV)
    wo3 = wo_t.reshape(N_HEADS, D_KV, D_MODEL)
    a_sub = jnp.einsum('dhf,ehf->hde', wq3, wk3).reshape(N_HEADS * D_MODEL, D_MODEL)
    vo = jnp.einsum('dhf,hfe->hde', wv3, wo3).reshape(N_HEADS * D_MODEL, D_MODEL)

    # Flatten batch into sublanes (contiguous, free reshape in XLA).
    hs_flat = hidden_states.reshape(B * Q, D_MODEL)
    kv_flat = kv.reshape(B * K, D_MODEL)

    # Single grid point: all operands (~40 KiB) live in VMEM for the whole call.
    out_flat = pl.pallas_call(
        cross_attn_kernel,
        out_shape=jax.ShapeDtypeStruct((B * Q, D_MODEL), jnp.float32),
    )(hs_flat, kv_flat, ln_w, a_sub, vo)
    return out_flat.reshape(B, Q, D_MODEL)


def reference(hidden_states, kv, ln_w, wq_t, wk_t, wv_t, wo_t):
    """Pure-JAX reference mirroring the PyTorch forward (unfused weights)."""
    var = jnp.mean(hidden_states * hidden_states, axis=-1, keepdims=True)
    norm = hidden_states * jax.lax.rsqrt(var + EPS) * ln_w[0]
    q = (norm @ wq_t).reshape(B, Q, N_HEADS, D_KV).transpose(0, 2, 1, 3)
    k = (kv @ wk_t).reshape(B, K, N_HEADS, D_KV).transpose(0, 2, 1, 3)
    v = (kv @ wv_t).reshape(B, K, N_HEADS, D_KV).transpose(0, 2, 1, 3)
    scores = jnp.einsum("bhqd,bhkd->bhqk", q, k)
    w = jax.nn.softmax(scores, axis=-1)
    ctx = jnp.einsum("bhqk,bhkd->bhqd", w, v)
    ctx = ctx.transpose(0, 2, 1, 3).reshape(B, Q, INNER)
    return hidden_states + ctx @ wo_t


if __name__ == "__main__":
    key = jax.random.PRNGKey(0)
    k_hs, k_kv, k_q, k_k, k_v, k_o, k_ln = jax.random.split(key, 7)

    hidden_states = jax.random.normal(k_hs, (B, Q, D_MODEL), jnp.float32)
    kv = jax.random.normal(k_kv, (B, K, D_MODEL), jnp.float32)

    # Deterministic parameter init (nn.Linear weights, stored transposed for x @ W^T).
    wq_t = 0.05 * jax.random.normal(k_q, (D_MODEL, INNER), jnp.float32)
    wk_t = 0.05 * jax.random.normal(k_k, (D_MODEL, INNER), jnp.float32)
    wv_t = 0.05 * jax.random.normal(k_v, (D_MODEL, INNER), jnp.float32)
    wo_t = 0.05 * jax.random.normal(k_o, (INNER, D_MODEL), jnp.float32)
    ln_w = (1.0 + 0.1 * jax.random.normal(k_ln, (1, D_MODEL), jnp.float32))

    out = amr_t5_layer_cross_attention(hidden_states, kv, ln_w, wq_t, wk_t, wv_t, wo_t)
    out = jax.block_until_ready(out)

    ref = reference(hidden_states, kv, ln_w, wq_t, wk_t, wv_t, wo_t)
    assert out.shape == (B, Q, D_MODEL)
    # Tolerance loosened (2e-3) because the softmax denominator uses the EUP
    # approximate reciprocal (~1e-3 relative error in the attention weights).
    assert jnp.allclose(out, ref, rtol=2e-3, atol=2e-3), "mismatch vs. pure-JAX reference"

    # present_key_value_state would be (None,) here (use_cache=False); only the
    # layer output tensor is produced by the kernel.
    # TODO(synk): relative-attention bias / attention mask / KV-cache paths are not
    # exercised by this eval-mode forward (all None / False) and are not implemented.
    print("KERNEL_OK")
</pallas_src>

<mosaic_0001>
module attributes {stable_mosaic.version = 11 : i64} {
  func.func @cross_attn_kernel(%arg0: memref<16x32xf32, #tpu.memory_space<vmem>>, %arg1: memref<32x32xf32, #tpu.memory_space<vmem>>, %arg2: memref<1x32xf32, #tpu.memory_space<vmem>>, %arg3: memref<128x32xf32, #tpu.memory_space<vmem>>, %arg4: memref<128x32xf32, #tpu.memory_space<vmem>>, %arg5: memref<16x32xf32, #tpu.memory_space<vmem>>) attributes {dimension_semantics = [], scalar_prefetch = 0 : i64, scratch_operands = 0 : i64, tpu.core_type = #tpu.core_type<tc>} {
    %c0 = arith.constant 0 : index
    %c0_0 = arith.constant 0 : index
    %0 = vector.load %arg2[%c0, %c0_0] : memref<1x32xf32, #tpu.memory_space<vmem>>, vector<1x32xf32>
    %c0_1 = arith.constant 0 : index
    %c0_2 = arith.constant 0 : index
    %1 = vector.load %arg0[%c0_1, %c0_2] : memref<16x32xf32, #tpu.memory_space<vmem>>, vector<16x32xf32>
    %c0_3 = arith.constant 0 : index
    %c0_4 = arith.constant 0 : index
    %2 = vector.load %arg1[%c0_3, %c0_4] : memref<32x32xf32, #tpu.memory_space<vmem>>, vector<32x32xf32>
    %c0_5 = arith.constant 0 : index
    %c0_6 = arith.constant 0 : index
    %3 = vector.load %arg3[%c0_5, %c0_6] : memref<128x32xf32, #tpu.memory_space<vmem>>, vector<128x32xf32>
    %c0_7 = arith.constant 0 : index
    %c0_8 = arith.constant 0 : index
    %4 = vector.load %arg4[%c0_7, %c0_8] : memref<128x32xf32, #tpu.memory_space<vmem>>, vector<128x32xf32>
    %5 = arith.mulf %1, %1 : vector<16x32xf32>
    %cst = arith.constant dense<0.000000e+00> : vector<16xf32>
    %6 = vector.multi_reduction <add>, %5, %cst [1] : vector<16x32xf32> to vector<16xf32>
    %7 = vector.shape_cast %6 : vector<16xf32> to vector<16x1xf32>
    %cst_9 = arith.constant 3.200000e+01 : f32
    %8 = vector.broadcast %cst_9 : f32 to vector<16x1xf32>
    %9 = arith.divf %7, %8 : vector<16x1xf32>
    %cst_10 = arith.constant 9.99999997E-7 : f32
    %10 = vector.broadcast %cst_10 : f32 to vector<16x1xf32>
    %11 = arith.addf %9, %10 : vector<16x1xf32>
    %12 = math.rsqrt %11 : vector<16x1xf32>
    %13 = vector.broadcast %12 : vector<16x1xf32> to vector<16x32xf32>
    %14 = arith.mulf %1, %13 : vector<16x32xf32>
    %15 = vector.broadcast %0 : vector<1x32xf32> to vector<16x32xf32>
    %16 = arith.mulf %14, %15 : vector<16x32xf32>
    %17 = vector.extract_strided_slice %2 {offsets = [0, 0], sizes = [16, 32], strides = [1, 1]} : vector<32x32xf32> to vector<16x32xf32>
    %18 = vector.extract_strided_slice %16 {offsets = [0, 0], sizes = [8, 32], strides = [1, 1]} : vector<16x32xf32> to vector<8x32xf32>
    %cst_11 = arith.constant dense<0.000000e+00> : vector<128x16xf32>
    %19 = tpu.matmul %3, %17, %cst_11 {dimension_numbers = #tpu.dot_dimension_numbers<[1], [1], [0], [0], [0, 0, 1, 0], [], []>} : vector<128x32xf32>, vector<16x32xf32>, vector<128x16xf32> -> vector<128x16xf32>
    %20 = vector.extract_strided_slice %19 {offsets = [0, 0], sizes = [32, 16], strides = [1, 1]} : vector<128x16xf32> to vector<32x16xf32>
    %cst_12 = arith.constant dense<0.000000e+00> : vector<8x16xf32>
    %21 = tpu.matmul %18, %20, %cst_12 {dimension_numbers = #tpu.dot_dimension_numbers<[1], [0], [0], [1], [0, 0, 1, 1], [], []>} : vector<8x32xf32>, vector<32x16xf32>, vector<8x16xf32> -> vector<8x16xf32>
    %22 = vector.extract_strided_slice %19 {offsets = [32, 0], sizes = [32, 16], strides = [1, 1]} : vector<128x16xf32> to vector<32x16xf32>
    %cst_13 = arith.constant dense<0.000000e+00> : vector<8x16xf32>
    %23 = tpu.matmul %18, %22, %cst_13 {dimension_numbers = #tpu.dot_dimension_numbers<[1], [0], [0], [1], [0, 0, 1, 1], [], []>} : vector<8x32xf32>, vector<32x16xf32>, vector<8x16xf32> -> vector<8x16xf32>
    %24 = vector.extract_strided_slice %19 {offsets = [64, 0], sizes = [32, 16], strides = [1, 1]} : vector<128x16xf32> to vector<32x16xf32>
    %cst_14 = arith.constant dense<0.000000e+00> : vector<8x16xf32>
    %25 = tpu.matmul %18, %24, %cst_14 {dimension_numbers = #tpu.dot_dimension_numbers<[1], [0], [0], [1], [0, 0, 1, 1], [], []>} : vector<8x32xf32>, vector<32x16xf32>, vector<8x16xf32> -> vector<8x16xf32>
    %26 = vector.extract_strided_slice %19 {offsets = [96, 0], sizes = [32, 16], strides = [1, 1]} : vector<128x16xf32> to vector<32x16xf32>
    %cst_15 = arith.constant dense<0.000000e+00> : vector<8x16xf32>
    %27 = tpu.matmul %18, %26, %cst_15 {dimension_numbers = #tpu.dot_dimension_numbers<[1], [0], [0], [1], [0, 0, 1, 1], [], []>} : vector<8x32xf32>, vector<32x16xf32>, vector<8x16xf32> -> vector<8x16xf32>
    %28 = vector.extract_strided_slice %2 {offsets = [16, 0], sizes = [16, 32], strides = [1, 1]} : vector<32x32xf32> to vector<16x32xf32>
    %29 = vector.extract_strided_slice %16 {offsets = [8, 0], sizes = [8, 32], strides = [1, 1]} : vector<16x32xf32> to vector<8x32xf32>
    %cst_16 = arith.constant dense<0.000000e+00> : vector<128x16xf32>
    %30 = tpu.matmul %3, %28, %cst_16 {dimension_numbers = #tpu.dot_dimension_numbers<[1], [1], [0], [0], [0, 0, 1, 0], [], []>} : vector<128x32xf32>, vector<16x32xf32>, vector<128x16xf32> -> vector<128x16xf32>
    %31 = vector.extract_strided_slice %30 {offsets = [0, 0], sizes = [32, 16], strides = [1, 1]} : vector<128x16xf32> to vector<32x16xf32>
    %cst_17 = arith.constant dense<0.000000e+00> : vector<8x16xf32>
    %32 = tpu.matmul %29, %31, %cst_17 {dimension_numbers = #tpu.dot_dimension_numbers<[1], [0], [0], [1], [0, 0, 1, 1], [], []>} : vector<8x32xf32>, vector<32x16xf32>, vector<8x16xf32> -> vector<8x16xf32>
    %33 = vector.extract_strided_slice %30 {offsets = [32, 0], sizes = [32, 16], strides = [1, 1]} : vector<128x16xf32> to vector<32x16xf32>
    %cst_18 = arith.constant dense<0.000000e+00> : vector<8x16xf32>
    %34 = tpu.matmul %29, %33, %cst_18 {dimension_numbers = #tpu.dot_dimension_numbers<[1], [0], [0], [1], [0, 0, 1, 1], [], []>} : vector<8x32xf32>, vector<32x16xf32>, vector<8x16xf32> -> vector<8x16xf32>
    %35 = vector.extract_strided_slice %30 {offsets = [64, 0], sizes = [32, 16], strides = [1, 1]} : vector<128x16xf32> to vector<32x16xf32>
    %cst_19 = arith.constant dense<0.000000e+00> : vector<8x16xf32>
    %36 = tpu.matmul %29, %35, %cst_19 {dimension_numbers = #tpu.dot_dimension_numbers<[1], [0], [0], [1], [0, 0, 1, 1], [], []>} : vector<8x32xf32>, vector<32x16xf32>, vector<8x16xf32> -> vector<8x16xf32>
    %37 = vector.extract_strided_slice %30 {offsets = [96, 0], sizes = [32, 16], strides = [1, 1]} : vector<128x16xf32> to vector<32x16xf32>
    %cst_20 = arith.constant dense<0.000000e+00> : vector<8x16xf32>
    %38 = tpu.matmul %29, %37, %cst_20 {dimension_numbers = #tpu.dot_dimension_numbers<[1], [0], [0], [1], [0, 0, 1, 1], [], []>} : vector<8x32xf32>, vector<32x16xf32>, vector<8x16xf32> -> vector<8x16xf32>
    %39 = tpu.concatenate %21, %23, %25, %27, %32, %34, %36, %38 in 0 : vector<8x16xf32>, vector<8x16xf32>, vector<8x16xf32>, vector<8x16xf32>, vector<8x16xf32>, vector<8x16xf32>, vector<8x16xf32>, vector<8x16xf32> -> vector<64x16xf32>
    %cst_21 = arith.constant dense<0xFF800000> : vector<64xf32>
    %40 = vector.multi_reduction <maximumf>, %39, %cst_21 [1] : vector<64x16xf32> to vector<64xf32>
    %41 = vector.shape_cast %40 : vector<64xf32> to vector<64x1xf32>
    %42 = vector.broadcast %41 : vector<64x1xf32> to vector<64x16xf32>
    %43 = arith.subf %39, %42 : vector<64x16xf32>
    %44 = math.exp %43 : vector<64x16xf32>
    %cst_22 = arith.constant dense<0.000000e+00> : vector<64xf32>
    %45 = vector.multi_reduction <add>, %44, %cst_22 [1] : vector<64x16xf32> to vector<64xf32>
    %46 = vector.shape_cast %45 : vector<64xf32> to vector<64x1xf32>
    %47 = tpu.reciprocal %46 {approx = true} : vector<64x1xf32> -> vector<64x1xf32>
    %48 = vector.broadcast %47 : vector<64x1xf32> to vector<64x16xf32>
    %49 = arith.mulf %44, %48 : vector<64x16xf32>
    %50 = vector.extract_strided_slice %2 {offsets = [0, 0], sizes = [16, 32], strides = [1, 1]} : vector<32x32xf32> to vector<16x32xf32>
    %51 = vector.extract_strided_slice %49 {offsets = [0, 0], sizes = [32, 16], strides = [1, 1]} : vector<64x16xf32> to vector<32x16xf32>
    %cst_23 = arith.constant dense<0.000000e+00> : vector<32x32xf32>
    %52 = tpu.matmul %51, %50, %cst_23 {dimension_numbers = #tpu.dot_dimension_numbers<[1], [0], [0], [1], [0, 0, 1, 1], [], []>} : vector<32x16xf32>, vector<16x32xf32>, vector<32x32xf32> -> vector<32x32xf32>
    %cst_24 = arith.constant 0.000000e+00 : f32
    %53 = vector.broadcast %cst_24 : f32 to vector<8x32xf32>
    %54 = vector.extract_strided_slice %52 {offsets = [0, 0], sizes = [8, 32], strides = [1, 1]} : vector<32x32xf32> to vector<8x32xf32>
    %55 = vector.extract_strided_slice %4 {offsets = [0, 0], sizes = [32, 32], strides = [1, 1]} : vector<128x32xf32> to vector<32x32xf32>
    %cst_25 = arith.constant dense<0.000000e+00> : vector<8x32xf32>
    %56 = tpu.matmul %54, %55, %cst_25 {dimension_numbers = #tpu.dot_dimension_numbers<[1], [0], [0], [1], [0, 0, 1, 1], [], []>} : vector<8x32xf32>, vector<32x32xf32>, vector<8x32xf32> -> vector<8x32xf32>
    %57 = arith.addf %53, %56 : vector<8x32xf32>
    %58 = vector.extract_strided_slice %52 {offsets = [8, 0], sizes = [8, 32], strides = [1, 1]} : vector<32x32xf32> to vector<8x32xf32>
    %59 = vector.extract_strided_slice %4 {offsets = [32, 0], sizes = [32, 32], strides = [1, 1]} : vector<128x32xf32> to vector<32x32xf32>
    %cst_26 = arith.constant dense<0.000000e+00> : vector<8x32xf32>
    %60 = tpu.matmul %58, %59, %cst_26 {dimension_numbers = #tpu.dot_dimension_numbers<[1], [0], [0], [1], [0, 0, 1, 1], [], []>} : vector<8x32xf32>, vector<32x32xf32>, vector<8x32xf32> -> vector<8x32xf32>
    %61 = arith.addf %57, %60 : vector<8x32xf32>
    %62 = vector.extract_strided_slice %52 {offsets = [16, 0], sizes = [8, 32], strides = [1, 1]} : vector<32x32xf32> to vector<8x32xf32>
    %63 = vector.extract_strided_slice %4 {offsets = [64, 0], sizes = [32, 32], strides = [1, 1]} : vector<128x32xf32> to vector<32x32xf32>
    %cst_27 = arith.constant dense<0.000000e+00> : vector<8x32xf32>
    %64 = tpu.matmul %62, %63, %cst_27 {dimension_numbers = #tpu.dot_dimension_numbers<[1], [0], [0], [1], [0, 0, 1, 1], [], []>} : vector<8x32xf32>, vector<32x32xf32>, vector<8x32xf32> -> vector<8x32xf32>
    %65 = arith.addf %61, %64 : vector<8x32xf32>
    %66 = vector.extract_strided_slice %52 {offsets = [24, 0], sizes = [8, 32], strides = [1, 1]} : vector<32x32xf32> to vector<8x32xf32>
    %67 = vector.extract_strided_slice %4 {offsets = [96, 0], sizes = [32, 32], strides = [1, 1]} : vector<128x32xf32> to vector<32x32xf32>
    %cst_28 = arith.constant dense<0.000000e+00> : vector<8x32xf32>
    %68 = tpu.matmul %66, %67, %cst_28 {dimension_numbers = #tpu.dot_dimension_numbers<[1], [0], [0], [1], [0, 0, 1, 1], [], []>} : vector<8x32xf32>, vector<32x32xf32>, vector<8x32xf32> -> vector<8x32xf32>
    %69 = arith.addf %65, %68 : vector<8x32xf32>
    %70 = vector.extract_strided_slice %2 {offsets = [16, 0], sizes = [16, 32], strides = [1, 1]} : vector<32x32xf32> to vector<16x32xf32>
    %71 = vector.extract_strided_slice %49 {offsets = [32, 0], sizes = [32, 16], strides = [1, 1]} : vector<64x16xf32> to vector<32x16xf32>
    %cst_29 = arith.constant dense<0.000000e+00> : vector<32x32xf32>
    %72 = tpu.matmul %71, %70, %cst_29 {dimension_numbers = #tpu.dot_dimension_numbers<[1], [0], [0], [1], [0, 0, 1, 1], [], []>} : vector<32x16xf32>, vector<16x32xf32>, vector<32x32xf32> -> vector<32x32xf32>
    %cst_30 = arith.constant 0.000000e+00 : f32
    %73 = vector.broadcast %cst_30 : f32 to vector<8x32xf32>
    %74 = vector.extract_strided_slice %72 {offsets = [0, 0], sizes = [8, 32], strides = [1, 1]} : vector<32x32xf32> to vector<8x32xf32>
    %75 = vector.extract_strided_slice %4 {offsets = [0, 0], sizes = [32, 32], strides = [1, 1]} : vector<128x32xf32> to vector<32x32xf32>
    %cst_31 = arith.constant dense<0.000000e+00> : vector<8x32xf32>
    %76 = tpu.matmul %74, %75, %cst_31 {dimension_numbers = #tpu.dot_dimension_numbers<[1], [0], [0], [1], [0, 0, 1, 1], [], []>} : vector<8x32xf32>, vector<32x32xf32>, vector<8x32xf32> -> vector<8x32xf32>
    %77 = arith.addf %73, %76 : vector<8x32xf32>
    %78 = vector.extract_strided_slice %72 {offsets = [8, 0], sizes = [8, 32], strides = [1, 1]} : vector<32x32xf32> to vector<8x32xf32>
    %79 = vector.extract_strided_slice %4 {offsets = [32, 0], sizes = [32, 32], strides = [1, 1]} : vector<128x32xf32> to vector<32x32xf32>
    %cst_32 = arith.constant dense<0.000000e+00> : vector<8x32xf32>
    %80 = tpu.matmul %78, %79, %cst_32 {dimension_numbers = #tpu.dot_dimension_numbers<[1], [0], [0], [1], [0, 0, 1, 1], [], []>} : vector<8x32xf32>, vector<32x32xf32>, vector<8x32xf32> -> vector<8x32xf32>
    %81 = arith.addf %77, %80 : vector<8x32xf32>
    %82 = vector.extract_strided_slice %72 {offsets = [16, 0], sizes = [8, 32], strides = [1, 1]} : vector<32x32xf32> to vector<8x32xf32>
    %83 = vector.extract_strided_slice %4 {offsets = [64, 0], sizes = [32, 32], strides = [1, 1]} : vector<128x32xf32> to vector<32x32xf32>
    %cst_33 = arith.constant dense<0.000000e+00> : vector<8x32xf32>
    %84 = tpu.matmul %82, %83, %cst_33 {dimension_numbers = #tpu.dot_dimension_numbers<[1], [0], [0], [1], [0, 0, 1, 1], [], []>} : vector<8x32xf32>, vector<32x32xf32>, vector<8x32xf32> -> vector<8x32xf32>
    %85 = arith.addf %81, %84 : vector<8x32xf32>
    %86 = vector.extract_strided_slice %72 {offsets = [24, 0], sizes = [8, 32], strides = [1, 1]} : vector<32x32xf32> to vector<8x32xf32>
    %87 = vector.extract_strided_slice %4 {offsets = [96, 0], sizes = [32, 32], strides = [1, 1]} : vector<128x32xf32> to vector<32x32xf32>
    %cst_34 = arith.constant dense<0.000000e+00> : vector<8x32xf32>
    %88 = tpu.matmul %86, %87, %cst_34 {dimension_numbers = #tpu.dot_dimension_numbers<[1], [0], [0], [1], [0, 0, 1, 1], [], []>} : vector<8x32xf32>, vector<32x32xf32>, vector<8x32xf32> -> vector<8x32xf32>
    %89 = arith.addf %85, %88 : vector<8x32xf32>
    %90 = tpu.concatenate %69, %89 in 0 : vector<8x32xf32>, vector<8x32xf32> -> vector<16x32xf32>
    %91 = arith.addf %1, %90 : vector<16x32xf32>
    %c0_35 = arith.constant 0 : index
    %c0_36 = arith.constant 0 : index
    %92 = vector.load %arg5[%c0_35, %c0_36] : memref<16x32xf32, #tpu.memory_space<vmem>>, vector<16x32xf32>
    tpu.vector_store %arg5[%c0_35, %c0_36], %91 {strides = array<i32>} : memref<16x32xf32, #tpu.memory_space<vmem>>, vector<16x32xf32>,
    return
  }
}

</mosaic_0001>

<llo_original>
// kernel: tpu_custom_call.1
$region0: #{tpu_custom_call.1}
  #allocation0 [shape = 'u32[]', space=smem, size = 0x4, offset = 0x4, fixed_abs, tag = 'smem constant byte address 0x4 - core index']
  #allocation1 [shape = 'u32[144,128]{1,0:T(1,128)}', space=vmem, size = 0x12000, scoped, tag = 'internal scratch']
  %s0 = inlined_call_operand.vmem [shape: f32[16,32], index: 0, kind: input, shape index: {}]
  %s1 = inlined_call_operand.vmem [shape: f32[32,32], index: 1, kind: input, shape index: {}]
  %s2 = inlined_call_operand.vmem [shape: f32[1,32], index: 2, kind: input, shape index: {}]
  %s3 = inlined_call_operand.vmem [shape: f32[128,32], index: 3, kind: input, shape index: {}]
  %s4 = inlined_call_operand.vmem [shape: f32[128,32], index: 4, kind: input, shape index: {}]
  %s5 = inlined_call_operand.hbm [shape: f32[16,32], index: 5, kind: output, shape index: {}]
  %s6 = sld [smem:[#allocation0]]
  $region30: #{tpu_custom_call.1} parent=0
    _
  %s8 = ssub.s32 1, %s6
  %s9 = scalar_select 0, %s8, %s6
  $region1: #{tpu_custom_call.1} parent=0
    #allocation2 [shape = 'u8[8192]{0}', space=vmem, size = 0x2000, scoped, tag = 'output window, operand 0, single buffered']
    #allocation3 [shape = 's32[1]{0}', space=sflag, size = 0x4, scoped, tag = 'scoped memory for tpu_custom_call.1']
    %10 = vsyncpa [#allocation3], 0
    // Predicated region
    $region2: #{tpu_custom_call.1} parent=1 // pred_check
      _
    $region3: #{tpu_custom_call.1} parent=1 // pred_check_branch
      %12 = sbr.rel (0) target = $region5
    $region4: #{tpu_custom_call.1} parent=1 // pred_region
      _
    $region5: #{tpu_custom_call.1} parent=1 // pred_fallthru
      _
    // Predicated region
    $region6: #{tpu_custom_call.1} parent=1 // pred_check
      _
    $region7: #{tpu_custom_call.1} parent=1 // pred_check_branch
      %14 = sbr.rel (0) target = $region9
    $region8: #{tpu_custom_call.1} parent=1 // pred_region
      _
    $region9: #{tpu_custom_call.1} parent=1 // pred_fallthru
      _
    // Predicated region
    $region10: #{tpu_custom_call.1} parent=1 // pred_check
      _
    $region11: #{tpu_custom_call.1} parent=1 // pred_check_branch
      %16 = sbr.rel (0) target = $region13
    $region12: #{tpu_custom_call.1} parent=1 // pred_region
      _
    $region13: #{tpu_custom_call.1} parent=1 // pred_fallthru
      _
    // Predicated region
    $region14: #{tpu_custom_call.1} parent=1 // pred_check
      _
    $region15: #{tpu_custom_call.1} parent=1 // pred_check_branch
      %18 = sbr.rel (0) target = $region17
    $region16: #{tpu_custom_call.1} parent=1 // pred_region
      _
    $region17: #{tpu_custom_call.1} parent=1 // pred_fallthru
      _
    // Predicated region
    $region18: #{tpu_custom_call.1} parent=1 // pred_check
      _
    $region19: #{tpu_custom_call.1} parent=1 // pred_check_branch
      %20 = sbr.rel (0) target = $region21
    $region20: #{tpu_custom_call.1} parent=1 // pred_region
      _
    $region21: #{tpu_custom_call.1} parent=1 // pred_fallthru
      _
    %v21 = vld [vmem:[%s2] sm:$0x1]
    %v22 = vld [vmem:[%s0] sm:$0xff]
    %v23 = vld [vmem:[%s0 + $0x8] sm:$0xff]
    %v24 = vld [vmem:[%s1] sm:$0xff]
    %v25 = vld [vmem:[%s1 + $0x8] sm:$0xff]
    %v26 = vld [vmem:[%s1 + $0x10] sm:$0xff]
    %v27 = vld [vmem:[%s1 + $0x18] sm:$0xff]
    %v28 = vld [vmem:[%s3] sm:$0xff]
    %v29 = vld [vmem:[%s3 + $0x8] sm:$0xff]
    %v30 = vld [vmem:[%s3 + $0x10] sm:$0xff]
    %v31 = vld [vmem:[%s3 + $0x18] sm:$0xff]
    %v32 = vld [vmem:[%s3 + $0x20] sm:$0xff]
    %v33 = vld [vmem:[%s3 + $0x28] sm:$0xff]
    %v34 = vld [vmem:[%s3 + $0x30] sm:$0xff]
    %v35 = vld [vmem:[%s3 + $0x38] sm:$0xff]
    %v36 = vld [vmem:[%s3 + $0x40] sm:$0xff]
    %v37 = vld [vmem:[%s3 + $0x48] sm:$0xff]
    %v38 = vld [vmem:[%s3 + $0x50] sm:$0xff]
    %v39 = vld [vmem:[%s3 + $0x58] sm:$0xff]
    %v40 = vld [vmem:[%s3 + $0x60] sm:$0xff]
    %v41 = vld [vmem:[%s3 + $0x68] sm:$0xff]
    %v42 = vld [vmem:[%s3 + $0x70] sm:$0xff]
    %v43 = vld [vmem:[%s3 + $0x78] sm:$0xff]
    %v44 = vld [vmem:[%s4] sm:$0xff]
    %v45 = vld [vmem:[%s4 + $0x8] sm:$0xff]
    %v46 = vld [vmem:[%s4 + $0x10] sm:$0xff]
    %v47 = vld [vmem:[%s4 + $0x18] sm:$0xff]
    %v48 = vld [vmem:[%s4 + $0x20] sm:$0xff]
    %v49 = vld [vmem:[%s4 + $0x28] sm:$0xff]
    %v50 = vld [vmem:[%s4 + $0x30] sm:$0xff]
    %v51 = vld [vmem:[%s4 + $0x38] sm:$0xff]
    %v52 = vld [vmem:[%s4 + $0x40] sm:$0xff]
    %v53 = vld [vmem:[%s4 + $0x48] sm:$0xff]
    %v54 = vld [vmem:[%s4 + $0x50] sm:$0xff]
    %v55 = vld [vmem:[%s4 + $0x58] sm:$0xff]
    %v56 = vld [vmem:[%s4 + $0x60] sm:$0xff]
    %v57 = vld [vmem:[%s4 + $0x68] sm:$0xff]
    %v58 = vld [vmem:[%s4 + $0x70] sm:$0xff]
    %v59 = vld [vmem:[%s4 + $0x78] sm:$0xff]
    %v60 = vmul.f32 %v22, %v22
    %v61 = vmul.f32 %v23, %v23
    %vm62 = vcmask 261120
    %v63 = vsel %vm62, %v60, 0.0
    %64 = vadd.xlane.f32.xlu0 %v63
    %v65 = vpop.xlane.xlu0 %64
    %v66 = vsel %vm62, %v61, 0.0
    %67 = vadd.xlane.f32.xlu0 %v66
    %v68 = vpop.xlane.xlu0 %67
    %v69 = vrcp.pop 32.0
    %v70 = vmul.f32 %v65, %v69
    %v71 = vmul.f32 %v68, %v69
    %v72 = vadd.f32 %v70, 1e-06
    %v73 = vadd.f32 %v71, 1e-06
    %v74 = vrsqrt.pop %v72
    %v75 = vrsqrt.pop %v73
    %v76 = vmul.f32 %v22, %v74
    %v77 = vmul.f32 %v23, %v75
    %v79 = vlaneseq
    %v80 = vshrl.u32 %v79, 7
    %v81 = vsub.s32 0, %v80
    %v82 = vrot.slane %v21, %v81
    %v84 = vmul.f32 %v76, %v82
    %v85 = vmul.f32 %v77, %v82
    %v87 = vsel %vm62, %v28, 0
    %v90 = vsel %vm62, %v29, 0
    %v93 = vsel %vm62, %v30, 0
    %v96 = vsel %vm62, %v31, 0
    %v99 = vsel %vm62, %v32, 0
    %v102 = vsel %vm62, %v33, 0
    %v105 = vsel %vm62, %v34, 0
    %v108 = vsel %vm62, %v35, 0
    %v111 = vsel %vm62, %v36, 0
    %v114 = vsel %vm62, %v37, 0
    %v117 = vsel %vm62, %v38, 0
    %v120 = vsel %vm62, %v39, 0
    %v123 = vsel %vm62, %v40, 0
    %v126 = vsel %vm62, %v41, 0
    %v129 = vsel %vm62, %v42, 0
    %v132 = vsel %vm62, %v43, 0
    %v135 = vsel %vm62, %v24, 0
    %v138 = vsel %vm62, %v25, 0
    %140 = vmatprep.subr.mxu0 0.0
    %141 = vmatpush1.xpose.msra.mxu0 %v135
    %142 = vmatprep.subr.mxu0 0.0
    %143 = vmatpush1.xpose.msra.mxu0 %v138
    %144 = vmatprep.subr.mxu0 0.0
    %145 = vmatpush1.xpose.msra.mxu0 0.0
    %146 = vmatprep.subr.mxu0 0.0
    %147 = vmatpush1.xpose.msra.mxu0 0.0
    %148 = vmatprep.subr.mxu0 0.0
    %149 = vmatpush1.xpose.msra.mxu0 0.0
    %150 = vmatprep.subr.mxu0 0.0
    %151 = vmatpush1.xpose.msra.mxu0 0.0
    %152 = vmatprep.subr.mxu0 0.0
    %153 = vmatpush1.xpose.msra.mxu0 0.0
    %154 = vmatprep.subr.mxu0 0.0
    %155 = vmatpush1.xpose.msra.mxu0 0.0
    %156 = vmatprep.subr.mxu0 0.0
    %157 = vmatpush1.xpose.msra.mxu0 0.0
    %158 = vmatprep.subr.mxu0 0.0
    %159 = vmatpush1.xpose.msra.mxu0 0.0
    %160 = vmatprep.subr.mxu0 0.0
    %161 = vmatpush1.xpose.msra.mxu0 0.0
    %162 = vmatprep.subr.mxu0 0.0
    %163 = vmatpush1.xpose.msra.mxu0 0.0
    %164 = vmatprep.subr.mxu0 0.0
    %165 = vmatpush1.xpose.msra.mxu0 0.0
    %166 = vmatprep.subr.mxu0 0.0
    %167 = vmatpush1.xpose.msra.mxu0 0.0
    %168 = vmatprep.subr.mxu0 0.0
    %169 = vmatpush1.xpose.msra.mxu0 0.0
    %170 = vmatprep.subr.mxu0 0.0
    %171 = vmatpush1.xpose.msra.mxu0 0.0
    %172 = vmatprep.subr.mxu0 0.0
    %173 = vmatpush1.xpose.msra.mxu0 0.0
    %174 = vmatprep.subr.mxu0 0.0
    %175 = vmatpush1.xpose.msra.mxu0 0.0
    %176 = vmatprep.subr.mxu0 0.0
    %177 = vmatpush1.xpose.msra.mxu0 0.0
    %178 = vmatprep.subr.mxu0 0.0
    %179 = vmatpush1.xpose.msra.mxu0 0.0
    %180 = vmatprep.subr.mxu0 0.0
    %181 = vmatpush1.xpose.msra.mxu0 0.0
    %182 = vmatprep.subr.mxu0 0.0
    %183 = vmatpush1.xpose.msra.mxu0 0.0
    %184 = vmatprep.subr.mxu0 0.0
    %185 = vmatpush1.xpose.msra.mxu0 0.0
    %186 = vmatprep.subr.mxu0 0.0
    %187 = vmatpush1.xpose.msra.mxu0 0.0
    %188 = vmatprep.subr.mxu0 0.0
    %189 = vmatpush1.xpose.msra.mxu0 0.0
    %190 = vmatprep.subr.mxu0 0.0
    %191 = vmatpush1.xpose.msra.mxu0 0.0
    %192 = vmatprep.subr.mxu0 0.0
    %193 = vmatpush1.xpose.msra.mxu0 0.0
    %194 = vmatprep.subr.mxu0 0.0
    %195 = vmatpush1.xpose.msra.mxu0 0.0
    %196 = vmatprep.subr.mxu0 0.0
    %197 = vmatpush1.xpose.msra.mxu0 0.0
    %198 = vmatprep.subr.mxu0 0.0
    %199 = vmatpush1.xpose.msra.mxu0 0.0
    %200 = vmatprep.subr.mxu0 0.0
    %201 = vmatpush1.xpose.msra.mxu0 0.0
    %202 = vmatprep.subr.mxu0 0.0
    %203 = vmatpush1.xpose.msra.mxu0 0.0
    %204 = vmatprep.mubr.f32.mxu0 0.0
    %205 = vmatmul.mubr.f32.gmra.mrb[0].mxu0 %v87
    %v206 = vpop.f32.mrb[0].mxu0
    %v207 = vadd.f32 0.0, %v206
    %v208 = vpop.f32.mrb[0].mxu0
    %209 = vmatprep.mubr.f32.mxu0 0.0
    %210 = vmatmul.mubr.f32.gmra.mrb[0].mxu0 %v90
    %v211 = vpop.f32.mrb[0].mxu0
    %v212 = vadd.f32 0.0, %v211
    %v213 = vpop.f32.mrb[0].mxu0
    %214 = vmatprep.mubr.f32.mxu0 0.0
    %215 = vmatmul.mubr.f32.gmra.mrb[0].mxu0 %v93
    %v216 = vpop.f32.mrb[0].mxu0
    %v217 = vadd.f32 0.0, %v216
    %v218 = vpop.f32.mrb[0].mxu0
    %219 = vmatprep.mubr.f32.mxu0 0.0
    %220 = vmatmul.mubr.f32.gmra.mrb[0].mxu0 %v96
    %v221 = vpop.f32.mrb[0].mxu0
    %v222 = vadd.f32 0.0, %v221
    %v223 = vpop.f32.mrb[0].mxu0
    %224 = vmatprep.mubr.f32.mxu0 0.0
    %225 = vmatmul.mubr.f32.gmra.mrb[0].mxu0 %v99
    %v226 = vpop.f32.mrb[0].mxu0
    %v227 = vadd.f32 0.0, %v226
    %v228 = vpop.f32.mrb[0].mxu0
    %229 = vmatprep.mubr.f32.mxu0 0.0
    %230 = vmatmul.mubr.f32.gmra.mrb[0].mxu0 %v102
    %v231 = vpop.f32.mrb[0].mxu0
    %v232 = vadd.f32 0.0, %v231
    %v233 = vpop.f32.mrb[0].mxu0
    %234 = vmatprep.mubr.f32.mxu0 0.0
    %235 = vmatmul.mubr.f32.gmra.mrb[0].mxu0 %v105
    %v236 = vpop.f32.mrb[0].mxu0
    %v237 = vadd.f32 0.0, %v236
    %v238 = vpop.f32.mrb[0].mxu0
    %239 = vmatprep.mubr.f32.mxu0 0.0
    %240 = vmatmul.mubr.f32.gmra.mrb[0].mxu0 %v108
    %v241 = vpop.f32.mrb[0].mxu0
    %v242 = vadd.f32 0.0, %v241
    %v243 = vpop.f32.mrb[0].mxu0
    %244 = vmatprep.mubr.f32.mxu0 0.0
    %245 = vmatmul.mubr.f32.gmra.mrb[0].mxu0 %v111
    %v246 = vpop.f32.mrb[0].mxu0
    %v247 = vadd.f32 0.0, %v246
    %v248 = vpop.f32.mrb[0].mxu0
    %249 = vmatprep.mubr.f32.mxu0 0.0
    %250 = vmatmul.mubr.f32.gmra.mrb[0].mxu0 %v114
    %v251 = vpop.f32.mrb[0].mxu0
    %v252 = vadd.f32 0.0, %v251
    %v253 = vpop.f32.mrb[0].mxu0
    %254 = vmatprep.mubr.f32.mxu0 0.0
    %255 = vmatmul.mubr.f32.gmra.mrb[0].mxu0 %v117
    %v256 = vpop.f32.mrb[0].mxu0
    %v257 = vadd.f32 0.0, %v256
    %v258 = vpop.f32.mrb[0].mxu0
    %259 = vmatprep.mubr.f32.mxu0 0.0
    %260 = vmatmul.mubr.f32.gmra.mrb[0].mxu0 %v120
    %v261 = vpop.f32.mrb[0].mxu0
    %v262 = vadd.f32 0.0, %v261
    %v263 = vpop.f32.mrb[0].mxu0
    %264 = vmatprep.mubr.f32.mxu0 0.0
    %265 = vmatmul.mubr.f32.gmra.mrb[0].mxu0 %v123
    %v266 = vpop.f32.mrb[0].mxu0
    %v267 = vadd.f32 0.0, %v266
    %v268 = vpop.f32.mrb[0].mxu0
    %269 = vmatprep.mubr.f32.mxu0 0.0
    %270 = vmatmul.mubr.f32.gmra.mrb[0].mxu0 %v126
    %v271 = vpop.f32.mrb[0].mxu0
    %v272 = vadd.f32 0.0, %v271
    %v273 = vpop.f32.mrb[0].mxu0
    %274 = vmatprep.mubr.f32.mxu0 0.0
    %275 = vmatmul.mubr.f32.gmra.mrb[0].mxu0 %v129
    %v276 = vpop.f32.mrb[0].mxu0
    %v277 = vadd.f32 0.0, %v276
    %v278 = vpop.f32.mrb[0].mxu0
    %279 = vmatprep.mubr.f32.mxu0 0.0
    %280 = vmatmul.mubr.f32.gmra.mrb[0].mxu0 %v132
    %v281 = vpop.f32.mrb[0].mxu0
    %v282 = vadd.f32 0.0, %v281
    %v283 = vpop.f32.mrb[0].mxu0
    %284 = vdwg.mxu0
    %v286 = vsel %vm62, %v84, 0
    %288 = vmatprep.subr.mxu0 0.0
    %289 = vmatpush1.msra.mxu0 %v207
    %290 = vmatprep.subr.mxu0 0.0
    %291 = vmatpush1.msra.mxu0 %v212
    %292 = vmatprep.subr.mxu0 0.0
    %293 = vmatpush1.msra.mxu0 %v217
    %294 = vmatprep.subr.mxu0 0.0
    %295 = vmatpush1.msra.mxu0 %v222
    %296 = vmatprep.subr.mxu0 0.0
    %297 = vmatpush1.msra.mxu0 0.0
    %298 = vmatprep.subr.mxu0 0.0
    %299 = vmatpush1.msra.mxu0 0.0
    %300 = vmatprep.subr.mxu0 0.0
    %301 = vmatpush1.msra.mxu0 0.0
    %302 = vmatprep.subr.mxu0 0.0
    %303 = vmatpush1.msra.mxu0 0.0
    %304 = vmatprep.subr.mxu0 0.0
    %305 = vmatpush1.msra.mxu0 0.0
    %306 = vmatprep.subr.mxu0 0.0
    %307 = vmatpush1.msra.mxu0 0.0
    %308 = vmatprep.subr.mxu0 0.0
    %309 = vmatpush1.msra.mxu0 0.0
    %310 = vmatprep.subr.mxu0 0.0
    %311 = vmatpush1.msra.mxu0 0.0
    %312 = vmatprep.subr.mxu0 0.0
    %313 = vmatpush1.msra.mxu0 0.0
    %314 = vmatprep.subr.mxu0 0.0
    %315 = vmatpush1.msra.mxu0 0.0
    %316 = vmatprep.subr.mxu0 0.0
    %317 = vmatpush1.msra.mxu0 0.0
    %318 = vmatprep.subr.mxu0 0.0
    %319 = vmatpush1.msra.mxu0 0.0
    %320 = vmatprep.subr.mxu0 0.0
    %321 = vmatpush1.msra.mxu0 0.0
    %322 = vmatprep.subr.mxu0 0.0
    %323 = vmatpush1.msra.mxu0 0.0
    %324 = vmatprep.subr.mxu0 0.0
    %325 = vmatpush1.msra.mxu0 0.0
    %326 = vmatprep.subr.mxu0 0.0
    %327 = vmatpush1.msra.mxu0 0.0
    %328 = vmatprep.subr.mxu0 0.0
    %329 = vmatpush1.msra.mxu0 0.0
    %330 = vmatprep.subr.mxu0 0.0
    %331 = vmatpush1.msra.mxu0 0.0
    %332 = vmatprep.subr.mxu0 0.0
    %333 = vmatpush1.msra.mxu0 0.0
    %334 = vmatprep.subr.mxu0 0.0
    %335 = vmatpush1.msra.mxu0 0.0
    %336 = vmatprep.subr.mxu0 0.0
    %337 = vmatpush1.msra.mxu0 0.0
    %338 = vmatprep.subr.mxu0 0.0
    %339 = vmatpush1.msra.mxu0 0.0
    %340 = vmatprep.subr.mxu0 0.0
    %341 = vmatpush1.msra.mxu0 0.0
    %342 = vmatprep.subr.mxu0 0.0
    %343 = vmatpush1.msra.mxu0 0.0
    %344 = vmatprep.subr.mxu0 0.0
    %345 = vmatpush1.msra.mxu0 0.0
    %346 = vmatprep.subr.mxu0 0.0
    %347 = vmatpush1.msra.mxu0 0.0
    %348 = vmatprep.subr.mxu0 0.0
    %349 = vmatpush1.msra.mxu0 0.0
    %350 = vmatprep.subr.mxu0 0.0
    %351 = vmatpush1.msra.mxu0 0.0
    %352 = vmatprep.mubr.f32.mxu0 0.0
    %353 = vmatmul.mubr.f32.gmra.mrb[0].mxu0 %v286
    %v354 = vpop.f32.mrb[0].mxu0
    %v355 = vadd.f32 0.0, %v354
    %v356 = vpop.f32.mrb[0].mxu0
    %357 = vdwg.mxu0
    %358 = vmatprep.subr.mxu0 0.0
    %359 = vmatpush1.msra.mxu0 %v227
    %360 = vmatprep.subr.mxu0 0.0
    %361 = vmatpush1.msra.mxu0 %v232
    %362 = vmatprep.subr.mxu0 0.0
    %363 = vmatpush1.msra.mxu0 %v237
    %364 = vmatprep.subr.mxu0 0.0
    %365 = vmatpush1.msra.mxu0 %v242
    %366 = vmatprep.subr.mxu0 0.0
    %367 = vmatpush1.msra.mxu0 0.0
    %368 = vmatprep.subr.mxu0 0.0
    %369 = vmatpush1.msra.mxu0 0.0
    %370 = vmatprep.subr.mxu0 0.0
    %371 = vmatpush1.msra.mxu0 0.0
    %372 = vmatprep.subr.mxu0 0.0
    %373 = vmatpush1.msra.mxu0 0.0
    %374 = vmatprep.subr.mxu0 0.0
    %375 = vmatpush1.msra.mxu0 0.0
    %376 = vmatprep.subr.mxu0 0.0
    %377 = vmatpush1.msra.mxu0 0.0
    %378 = vmatprep.subr.mxu0 0.0
    %379 = vmatpush1.msra.mxu0 0.0
    %380 = vmatprep.subr.mxu0 0.0
    %381 = vmatpush1.msra.mxu0 0.0
    %382 = vmatprep.subr.mxu0 0.0
    %383 = vmatpush1.msra.mxu0 0.0
    %384 = vmatprep.subr.mxu0 0.0
    %385 = vmatpush1.msra.mxu0 0.0
    %386 = vmatprep.subr.mxu0 0.0
    %387 = vmatpush1.msra.mxu0 0.0
    %388 = vmatprep.subr.mxu0 0.0
    %389 = vmatpush1.msra.mxu0 0.0
    %390 = vmatprep.subr.mxu0 0.0
    %391 = vmatpush1.msra.mxu0 0.0
    %392 = vmatprep.subr.mxu0 0.0
    %393 = vmatpush1.msra.mxu0 0.0
    %394 = vmatprep.subr.mxu0 0.0
    %395 = vmatpush1.msra.mxu0 0.0
    %396 = vmatprep.subr.mxu0 0.0
    %397 = vmatpush1.msra.mxu0 0.0
    %398 = vmatprep.subr.mxu0 0.0
    %399 = vmatpush1.msra.mxu0 0.0
    %400 = vmatprep.subr.mxu0 0.0
    %401 = vmatpush1.msra.mxu0 0.0
    %402 = vmatprep.subr.mxu0 0.0
    %403 = vmatpush1.msra.mxu0 0.0
    %404 = vmatprep.subr.mxu0 0.0
    %405 = vmatpush1.msra.mxu0 0.0
    %406 = vmatprep.subr.mxu0 0.0
    %407 = vmatpush1.msra.mxu0 0.0
    %408 = vmatprep.subr.mxu0 0.0
    %409 = vmatpush1.msra.mxu0 0.0
    %410 = vmatprep.subr.mxu0 0.0
    %411 = vmatpush1.msra.mxu0 0.0
    %412 = vmatprep.subr.mxu0 0.0
    %413 = vmatpush1.msra.mxu0 0.0
    %414 = vmatprep.subr.mxu0 0.0
    %415 = vmatpush1.msra.mxu0 0.0
    %416 = vmatprep.subr.mxu0 0.0
    %417 = vmatpush1.msra.mxu0 0.0
    %418 = vmatprep.subr.mxu0 0.0
    %419 = vmatpush1.msra.mxu0 0.0
    %420 = vmatprep.subr.mxu0 0.0
    %421 = vmatpush1.msra.mxu0 0.0
    %422 = vmatprep.mubr.f32.mxu0 0.0
    %423 = vmatmul.mubr.f32.gmra.mrb[0].mxu0 %v286
    %v424 = vpop.f32.mrb[0].mxu0
    %v425 = vadd.f32 0.0, %v424
    %v426 = vpop.f32.mrb[0].mxu0
    %427 = vdwg.mxu0
    %428 = vmatprep.subr.mxu0 0.0
    %429 = vmatpush1.msra.mxu0 %v247
    %430 = vmatprep.subr.mxu0 0.0
    %431 = vmatpush1.msra.mxu0 %v252
    %432 = vmatprep.subr.mxu0 0.0
    %433 = vmatpush1.msra.mxu0 %v257
    %434 = vmatprep.subr.mxu0 0.0
    %435 = vmatpush1.msra.mxu0 %v262
    %436 = vmatprep.subr.mxu0 0.0
    %437 = vmatpush1.msra.mxu0 0.0
    %438 = vmatprep.subr.mxu0 0.0
    %439 = vmatpush1.msra.mxu0 0.0
    %440 = vmatprep.subr.mxu0 0.0
    %441 = vmatpush1.msra.mxu0 0.0
    %442 = vmatprep.subr.mxu0 0.0
    %443 = vmatpush1.msra.mxu0 0.0
    %444 = vmatprep.subr.mxu0 0.0
    %445 = vmatpush1.msra.mxu0 0.0
    %446 = vmatprep.subr.mxu0 0.0
    %447 = vmatpush1.msra.mxu0 0.0
    %448 = vmatprep.subr.mxu0 0.0
    %449 = vmatpush1.msra.mxu0 0.0
    %450 = vmatprep.subr.mxu0 0.0
    %451 = vmatpush1.msra.mxu0 0.0
    %452 = vmatprep.subr.mxu0 0.0
    %453 = vmatpush1.msra.mxu0 0.0
    %454 = vmatprep.subr.mxu0 0.0
    %455 = vmatpush1.msra.mxu0 0.0
    %456 = vmatprep.subr.mxu0 0.0
    %457 = vmatpush1.msra.mxu0 0.0
    %458 = vmatprep.subr.mxu0 0.0
    %459 = vmatpush1.msra.mxu0 0.0
    %460 = vmatprep.subr.mxu0 0.0
    %461 = vmatpush1.msra.mxu0 0.0
    %462 = vmatprep.subr.mxu0 0.0
    %463 = vmatpush1.msra.mxu0 0.0
    %464 = vmatprep.subr.mxu0 0.0
    %465 = vmatpush1.msra.mxu0 0.0
    %466 = vmatprep.subr.mxu0 0.0
    %467 = vmatpush1.msra.mxu0 0.0
    %468 = vmatprep.subr.mxu0 0.0
    %469 = vmatpush1.msra.mxu0 0.0
    %470 = vmatprep.subr.mxu0 0.0
    %471 = vmatpush1.msra.mxu0 0.0
    %472 = vmatprep.subr.mxu0 0.0
    %473 = vmatpush1.msra.mxu0 0.0
    %474 = vmatprep.subr.mxu0 0.0
    %475 = vmatpush1.msra.mxu0 0.0
    %476 = vmatprep.subr.mxu0 0.0
    %477 = vmatpush1.msra.mxu0 0.0
    %478 = vmatprep.subr.mxu0 0.0
    %479 = vmatpush1.msra.mxu0 0.0
    %480 = vmatprep.subr.mxu0 0.0
    %481 = vmatpush1.msra.mxu0 0.0
    %482 = vmatprep.subr.mxu0 0.0
    %483 = vmatpush1.msra.mxu0 0.0
    %484 = vmatprep.subr.mxu0 0.0
    %485 = vmatpush1.msra.mxu0 0.0
    %486 = vmatprep.subr.mxu0 0.0
    %487 = vmatpush1.msra.mxu0 0.0
    %488 = vmatprep.subr.mxu0 0.0
    %489 = vmatpush1.msra.mxu0 0.0
    %490 = vmatprep.subr.mxu0 0.0
    %491 = vmatpush1.msra.mxu0 0.0
    %492 = vmatprep.mubr.f32.mxu0 0.0
    %493 = vmatmul.mubr.f32.gmra.mrb[0].mxu0 %v286
    %v494 = vpop.f32.mrb[0].mxu0
    %v495 = vadd.f32 0.0, %v494
    %v496 = vpop.f32.mrb[0].mxu0
    %497 = vdwg.mxu0
    %498 = vmatprep.subr.mxu0 0.0
    %499 = vmatpush1.msra.mxu0 %v267
    %500 = vmatprep.subr.mxu0 0.0
    %501 = vmatpush1.msra.mxu0 %v272
    %502 = vmatprep.subr.mxu0 0.0
    %503 = vmatpush1.msra.mxu0 %v277
    %504 = vmatprep.subr.mxu0 0.0
    %505 = vmatpush1.msra.mxu0 %v282
    %506 = vmatprep.subr.mxu0 0.0
    %507 = vmatpush1.msra.mxu0 0.0
    %508 = vmatprep.subr.mxu0 0.0
    %509 = vmatpush1.msra.mxu0 0.0
    %510 = vmatprep.subr.mxu0 0.0
    %511 = vmatpush1.msra.mxu0 0.0
    %512 = vmatprep.subr.mxu0 0.0
    %513 = vmatpush1.msra.mxu0 0.0
    %514 = vmatprep.subr.mxu0 0.0
    %515 = vmatpush1.msra.mxu0 0.0
    %516 = vmatprep.subr.mxu0 0.0
    %517 = vmatpush1.msra.mxu0 0.0
    %518 = vmatprep.subr.mxu0 0.0
    %519 = vmatpush1.msra.mxu0 0.0
    %520 = vmatprep.subr.mxu0 0.0
    %521 = vmatpush1.msra.mxu0 0.0
    %522 = vmatprep.subr.mxu0 0.0
    %523 = vmatpush1.msra.mxu0 0.0
    %524 = vmatprep.subr.mxu0 0.0
    %525 = vmatpush1.msra.mxu0 0.0
    %526 = vmatprep.subr.mxu0 0.0
    %527 = vmatpush1.msra.mxu0 0.0
    %528 = vmatprep.subr.mxu0 0.0
    %529 = vmatpush1.msra.mxu0 0.0
    %530 = vmatprep.subr.mxu0 0.0
    %531 = vmatpush1.msra.mxu0 0.0
    %532 = vmatprep.subr.mxu0 0.0
    %533 = vmatpush1.msra.mxu0 0.0
    %534 = vmatprep.subr.mxu0 0.0
    %535 = vmatpush1.msra.mxu0 0.0
    %536 = vmatprep.subr.mxu0 0.0
    %537 = vmatpush1.msra.mxu0 0.0
    %538 = vmatprep.subr.mxu0 0.0
    %539 = vmatpush1.msra.mxu0 0.0
    %540 = vmatprep.subr.mxu0 0.0
    %541 = vmatpush1.msra.mxu0 0.0
    %542 = vmatprep.subr.mxu0 0.0
    %543 = vmatpush1.msra.mxu0 0.0
    %544 = vmatprep.subr.mxu0 0.0
    %545 = vmatpush1.msra.mxu0 0.0
    %546 = vmatprep.subr.mxu0 0.0
    %547 = vmatpush1.msra.mxu0 0.0
    %548 = vmatprep.subr.mxu0 0.0
    %549 = vmatpush1.msra.mxu0 0.0
    %550 = vmatprep.subr.mxu0 0.0
    %551 = vmatpush1.msra.mxu0 0.0
    %552 = vmatprep.subr.mxu0 0.0
    %553 = vmatpush1.msra.mxu0 0.0
    %554 = vmatprep.subr.mxu0 0.0
    %555 = vmatpush1.msra.mxu0 0.0
    %556 = vmatprep.subr.mxu0 0.0
    %557 = vmatpush1.msra.mxu0 0.0
    %558 = vmatprep.subr.mxu0 0.0
    %559 = vmatpush1.msra.mxu0 0.0
    %560 = vmatprep.subr.mxu0 0.0
    %561 = vmatpush1.msra.mxu0 0.0
    %562 = vmatprep.mubr.f32.mxu0 0.0
    %563 = vmatmul.mubr.f32.gmra.mrb[0].mxu0 %v286
    %v564 = vpop.f32.mrb[0].mxu0
    %v565 = vadd.f32 0.0, %v564
    %v566 = vpop.f32.mrb[0].mxu0
    %567 = vdwg.mxu0
    %v569 = vsel %vm62, %v26, 0
    %v572 = vsel %vm62, %v27, 0
    %574 = vmatprep.subr.mxu0 0.0
    %575 = vmatpush1.xpose.msra.mxu0 %v569
    %576 = vmatprep.subr.mxu0 0.0
    %577 = vmatpush1.xpose.msra.mxu0 %v572
    %578 = vmatprep.subr.mxu0 0.0
    %579 = vmatpush1.xpose.msra.mxu0 0.0
    %580 = vmatprep.subr.mxu0 0.0
    %581 = vmatpush1.xpose.msra.mxu0 0.0
    %582 = vmatprep.subr.mxu0 0.0
    %583 = vmatpush1.xpose.msra.mxu0 0.0
    %584 = vmatprep.subr.mxu0 0.0
    %585 = vmatpush1.xpose.msra.mxu0 0.0
    %586 = vmatprep.subr.mxu0 0.0
    %587 = vmatpush1.xpose.msra.mxu0 0.0
    %588 = vmatprep.subr.mxu0 0.0
    %589 = vmatpush1.xpose.msra.mxu0 0.0
    %590 = vmatprep.subr.mxu0 0.0
    %591 = vmatpush1.xpose.msra.mxu0 0.0
    %592 = vmatprep.subr.mxu0 0.0
    %593 = vmatpush1.xpose.msra.mxu0 0.0
    %594 = vmatprep.subr.mxu0 0.0
    %595 = vmatpush1.xpose.msra.mxu0 0.0
    %596 = vmatprep.subr.mxu0 0.0
    %597 = vmatpush1.xpose.msra.mxu0 0.0
    %598 = vmatprep.subr.mxu0 0.0
    %599 = vmatpush1.xpose.msra.mxu0 0.0
    %600 = vmatprep.subr.mxu0 0.0
    %601 = vmatpush1.xpose.msra.mxu0 0.0
    %602 = vmatprep.subr.mxu0 0.0
    %603 = vmatpush1.xpose.msra.mxu0 0.0
    %604 = vmatprep.subr.mxu0 0.0
    %605 = vmatpush1.xpose.msra.mxu0 0.0
    %606 = vmatprep.subr.mxu0 0.0
    %607 = vmatpush1.xpose.msra.mxu0 0.0
    %608 = vmatprep.subr.mxu0 0.0
    %609 = vmatpush1.xpose.msra.mxu0 0.0
    %610 = vmatprep.subr.mxu0 0.0
    %611 = vmatpush1.xpose.msra.mxu0 0.0
    %612 = vmatprep.subr.mxu0 0.0
    %613 = vmatpush1.xpose.msra.mxu0 0.0
    %614 = vmatprep.subr.mxu0 0.0
    %615 = vmatpush1.xpose.msra.mxu0 0.0
    %616 = vmatprep.subr.mxu0 0.0
    %617 = vmatpush1.xpose.msra.mxu0 0.0
    %618 = vmatprep.subr.mxu0 0.0
    %619 = vmatpush1.xpose.msra.mxu0 0.0
    %620 = vmatprep.subr.mxu0 0.0
    %621 = vmatpush1.xpose.msra.mxu0 0.0
    %622 = vmatprep.subr.mxu0 0.0
    %623 = vmatpush1.xpose.msra.mxu0 0.0
    %624 = vmatprep.subr.mxu0 0.0
    %625 = vmatpush1.xpose.msra.mxu0 0.0
    %626 = vmatprep.subr.mxu0 0.0
    %627 = vmatpush1.xpose.msra.mxu0 0.0
    %628 = vmatprep.subr.mxu0 0.0
    %629 = vmatpush1.xpose.msra.mxu0 0.0
    %630 = vmatprep.subr.mxu0 0.0
    %631 = vmatpush1.xpose.msra.mxu0 0.0
    %632 = vmatprep.subr.mxu0 0.0
    %633 = vmatpush1.xpose.msra.mxu0 0.0
    %634 = vmatprep.subr.mxu0 0.0
    %635 = vmatpush1.xpose.msra.mxu0 0.0
    %636 = vmatprep.subr.mxu0 0.0
    %637 = vmatpush1.xpose.msra.mxu0 0.0
    %638 = vmatprep.mubr.f32.mxu0 0.0
    %639 = vmatmul.mubr.f32.gmra.mrb[0].mxu0 %v87
    %v640 = vpop.f32.mrb[0].mxu0
    %v641 = vadd.f32 0.0, %v640
    %v642 = vpop.f32.mrb[0].mxu0
    %643 = vmatprep.mubr.f32.mxu0 0.0
    %644 = vmatmul.mubr.f32.gmra.mrb[0].mxu0 %v90
    %v645 = vpop.f32.mrb[0].mxu0
    %v646 = vadd.f32 0.0, %v645
    %v647 = vpop.f32.mrb[0].mxu0
    %648 = vmatprep.mubr.f32.mxu0 0.0
    %649 = vmatmul.mubr.f32.gmra.mrb[0].mxu0 %v93
    %v650 = vpop.f32.mrb[0].mxu0
    %v651 = vadd.f32 0.0, %v650
    %v652 = vpop.f32.mrb[0].mxu0
    %653 = vmatprep.mubr.f32.mxu0 0.0
    %654 = vmatmul.mubr.f32.gmra.mrb[0].mxu0 %v96
    %v655 = vpop.f32.mrb[0].mxu0
    %v656 = vadd.f32 0.0, %v655
    %v657 = vpop.f32.mrb[0].mxu0
    %658 = vmatprep.mubr.f32.mxu0 0.0
    %659 = vmatmul.mubr.f32.gmra.mrb[0].mxu0 %v99
    %v660 = vpop.f32.mrb[0].mxu0
    %v661 = vadd.f32 0.0, %v660
    %v662 = vpop.f32.mrb[0].mxu0
    %663 = vmatprep.mubr.f32.mxu0 0.0
    %664 = vmatmul.mubr.f32.gmra.mrb[0].mxu0 %v102
    %v665 = vpop.f32.mrb[0].mxu0
    %v666 = vadd.f32 0.0, %v665
    %v667 = vpop.f32.mrb[0].mxu0
    %668 = vmatprep.mubr.f32.mxu0 0.0
    %669 = vmatmul.mubr.f32.gmra.mrb[0].mxu0 %v105
    %v670 = vpop.f32.mrb[0].mxu0
    %v671 = vadd.f32 0.0, %v670
    %v672 = vpop.f32.mrb[0].mxu0
    %673 = vmatprep.mubr.f32.mxu0 0.0
    %674 = vmatmul.mubr.f32.gmra.mrb[0].mxu0 %v108
    %v675 = vpop.f32.mrb[0].mxu0
    %v676 = vadd.f32 0.0, %v675
    %v677 = vpop.f32.mrb[0].mxu0
    %678 = vmatprep.mubr.f32.mxu0 0.0
    %679 = vmatmul.mubr.f32.gmra.mrb[0].mxu0 %v111
    %v680 = vpop.f32.mrb[0].mxu0
    %v681 = vadd.f32 0.0, %v680
    %v682 = vpop.f32.mrb[0].mxu0
    %683 = vmatprep.mubr.f32.mxu0 0.0
    %684 = vmatmul.mubr.f32.gmra.mrb[0].mxu0 %v114
    %v685 = vpop.f32.mrb[0].mxu0
    %v686 = vadd.f32 0.0, %v685
    %v687 = vpop.f32.mrb[0].mxu0
    %688 = vmatprep.mubr.f32.mxu0 0.0
    %689 = vmatmul.mubr.f32.gmra.mrb[0].mxu0 %v117
    %v690 = vpop.f32.mrb[0].mxu0
    %v691 = vadd.f32 0.0, %v690
    %v692 = vpop.f32.mrb[0].mxu0
    %693 = vmatprep.mubr.f32.mxu0 0.0
    %694 = vmatmul.mubr.f32.gmra.mrb[0].mxu0 %v120
    %v695 = vpop.f32.mrb[0].mxu0
    %v696 = vadd.f32 0.0, %v695
    %v697 = vpop.f32.mrb[0].mxu0
    %698 = vmatprep.mubr.f32.mxu0 0.0
    %699 = vmatmul.mubr.f32.gmra.mrb[0].mxu0 %v123
    %v700 = vpop.f32.mrb[0].mxu0
    %v701 = vadd.f32 0.0, %v700
    %v702 = vpop.f32.mrb[0].mxu0
    %703 = vmatprep.mubr.f32.mxu0 0.0
    %704 = vmatmul.mubr.f32.gmra.mrb[0].mxu0 %v126
    %v705 = vpop.f32.mrb[0].mxu0
    %v706 = vadd.f32 0.0, %v705
    %v707 = vpop.f32.mrb[0].mxu0
    %708 = vmatprep.mubr.f32.mxu0 0.0
    %709 = vmatmul.mubr.f32.gmra.mrb[0].mxu0 %v129
    %v710 = vpop.f32.mrb[0].mxu0
    %v711 = vadd.f32 0.0, %v710
    %v712 = vpop.f32.mrb[0].mxu0
    %713 = vmatprep.mubr.f32.mxu0 0.0
    %714 = vmatmul.mubr.f32.gmra.mrb[0].mxu0 %v132
    %v715 = vpop.f32.mrb[0].mxu0
    %v716 = vadd.f32 0.0, %v715
    %v717 = vpop.f32.mrb[0].mxu0
    %718 = vdwg.mxu0
    %v720 = vsel %vm62, %v85, 0
    %722 = vmatprep.subr.mxu0 0.0
    %723 = vmatpush1.msra.mxu0 %v641
    %724 = vmatprep.subr.mxu0 0.0
    %725 = vmatpush1.msra.mxu0 %v646
    %726 = vmatprep.subr.mxu0 0.0
    %727 = vmatpush1.msra.mxu0 %v651
    %728 = vmatprep.subr.mxu0 0.0
    %729 = vmatpush1.msra.mxu0 %v656
    %730 = vmatprep.subr.mxu0 0.0
    %731 = vmatpush1.msra.mxu0 0.0
    %732 = vmatprep.subr.mxu0 0.0
    %733 = vmatpush1.msra.mxu0 0.0
    %734 = vmatprep.subr.mxu0 0.0
    %735 = vmatpush1.msra.mxu0 0.0
    %736 = vmatprep.subr.mxu0 0.0
    %737 = vmatpush1.msra.mxu0 0.0
    %738 = vmatprep.subr.mxu0 0.0
    %739 = vmatpush1.msra.mxu0 0.0
    %740 = vmatprep.subr.mxu0 0.0
    %741 = vmatpush1.msra.mxu0 0.0
    %742 = vmatprep.subr.mxu0 0.0
    %743 = vmatpush1.msra.mxu0 0.0
    %744 = vmatprep.subr.mxu0 0.0
    %745 = vmatpush1.msra.mxu0 0.0
    %746 = vmatprep.subr.mxu0 0.0
    %747 = vmatpush1.msra.mxu0 0.0
    %748 = vmatprep.subr.mxu0 0.0
    %749 = vmatpush1.msra.mxu0 0.0
    %750 = vmatprep.subr.mxu0 0.0
    %751 = vmatpush1.msra.mxu0 0.0
    %752 = vmatprep.subr.mxu0 0.0
    %753 = vmatpush1.msra.mxu0 0.0
    %754 = vmatprep.subr.mxu0 0.0
    %755 = vmatpush1.msra.mxu0 0.0
    %756 = vmatprep.subr.mxu0 0.0
    %757 = vmatpush1.msra.mxu0 0.0
    %758 = vmatprep.subr.mxu0 0.0
    %759 = vmatpush1.msra.mxu0 0.0
    %760 = vmatprep.subr.mxu0 0.0
    %761 = vmatpush1.msra.mxu0 0.0
    %762 = vmatprep.subr.mxu0 0.0
    %763 = vmatpush1.msra.mxu0 0.0
    %764 = vmatprep.subr.mxu0 0.0
    %765 = vmatpush1.msra.mxu0 0.0
    %766 = vmatprep.subr.mxu0 0.0
    %767 = vmatpush1.msra.mxu0 0.0
    %768 = vmatprep.subr.mxu0 0.0
    %769 = vmatpush1.msra.mxu0 0.0
    %770 = vmatprep.subr.mxu0 0.0
    %771 = vmatpush1.msra.mxu0 0.0
    %772 = vmatprep.subr.mxu0 0.0
    %773 = vmatpush1.msra.mxu0 0.0
    %774 = vmatprep.subr.mxu0 0.0
    %775 = vmatpush1.msra.mxu0 0.0
    %776 = vmatprep.subr.mxu0 0.0
    %777 = vmatpush1.msra.mxu0 0.0
    %778 = vmatprep.subr.mxu0 0.0
    %779 = vmatpush1.msra.mxu0 0.0
    %780 = vmatprep.subr.mxu0 0.0
    %781 = vmatpush1.msra.mxu0 0.0
    %782 = vmatprep.subr.mxu0 0.0
    %783 = vmatpush1.msra.mxu0 0.0
    %784 = vmatprep.subr.mxu0 0.0
    %785 = vmatpush1.msra.mxu0 0.0
    %786 = vmatprep.mubr.f32.mxu0 0.0
    %787 = vmatmul.mubr.f32.gmra.mrb[0].mxu0 %v720
    %v788 = vpop.f32.mrb[0].mxu0
    %v789 = vadd.f32 0.0, %v788
    %v790 = vpop.f32.mrb[0].mxu0
    %791 = vdwg.mxu0
    %792 = vmatprep.subr.mxu0 0.0
    %793 = vmatpush1.msra.mxu0 %v661
    %794 = vmatprep.subr.mxu0 0.0
    %795 = vmatpush1.msra.mxu0 %v666
    %796 = vmatprep.subr.mxu0 0.0
    %797 = vmatpush1.msra.mxu0 %v671
    %798 = vmatprep.subr.mxu0 0.0
    %799 = vmatpush1.msra.mxu0 %v676
    %800 = vmatprep.subr.mxu0 0.0
    %801 = vmatpush1.msra.mxu0 0.0
    %802 = vmatprep.subr.mxu0 0.0
    %803 = vmatpush1.msra.mxu0 0.0
    %804 = vmatprep.subr.mxu0 0.0
    %805 = vmatpush1.msra.mxu0 0.0
    %806 = vmatprep.subr.mxu0 0.0
    %807 = vmatpush1.msra.mxu0 0.0
    %808 = vmatprep.subr.mxu0 0.0
    %809 = vmatpush1.msra.mxu0 0.0
    %810 = vmatprep.subr.mxu0 0.0
    %811 = vmatpush1.msra.mxu0 0.0
    %812 = vmatprep.subr.mxu0 0.0
    %813 = vmatpush1.msra.mxu0 0.0
    %814 = vmatprep.subr.mxu0 0.0
    %815 = vmatpush1.msra.mxu0 0.0
    %816 = vmatprep.subr.mxu0 0.0
    %817 = vmatpush1.msra.mxu0 0.0
    %818 = vmatprep.subr.mxu0 0.0
    %819 = vmatpush1.msra.mxu0 0.0
    %820 = vmatprep.subr.mxu0 0.0
    %821 = vmatpush1.msra.mxu0 0.0
    %822 = vmatprep.subr.mxu0 0.0
    %823 = vmatpush1.msra.mxu0 0.0
    %824 = vmatprep.subr.mxu0 0.0
    %825 = vmatpush1.msra.mxu0 0.0
    %826 = vmatprep.subr.mxu0 0.0
    %827 = vmatpush1.msra.mxu0 0.0
    %828 = vmatprep.subr.mxu0 0.0
    %829 = vmatpush1.msra.mxu0 0.0
    %830 = vmatprep.subr.mxu0 0.0
    %831 = vmatpush1.msra.mxu0 0.0
    %832 = vmatprep.subr.mxu0 0.0
    %833 = vmatpush1.msra.mxu0 0.0
    %834 = vmatprep.subr.mxu0 0.0
    %835 = vmatpush1.msra.mxu0 0.0
    %836 = vmatprep.subr.mxu0 0.0
    %837 = vmatpush1.msra.mxu0 0.0
    %838 = vmatprep.subr.mxu0 0.0
    %839 = vmatpush1.msra.mxu0 0.0
    %840 = vmatprep.subr.mxu0 0.0
    %841 = vmatpush1.msra.mxu0 0.0
    %842 = vmatprep.subr.mxu0 0.0
    %843 = vmatpush1.msra.mxu0 0.0
    %844 = vmatprep.subr.mxu0 0.0
    %845 = vmatpush1.msra.mxu0 0.0
    %846 = vmatprep.subr.mxu0 0.0
    %847 = vmatpush1.msra.mxu0 0.0
    %848 = vmatprep.subr.mxu0 0.0
    %849 = vmatpush1.msra.mxu0 0.0
    %850 = vmatprep.subr.mxu0 0.0
    %851 = vmatpush1.msra.mxu0 0.0
    %852 = vmatprep.subr.mxu0 0.0
    %853 = vmatpush1.msra.mxu0 0.0
    %854 = vmatprep.subr.mxu0 0.0
    %855 = vmatpush1.msra.mxu0 0.0
    %856 = vmatprep.mubr.f32.mxu0 0.0
    %857 = vmatmul.mubr.f32.gmra.mrb[0].mxu0 %v720
    %v858 = vpop.f32.mrb[0].mxu0
    %v859 = vadd.f32 0.0, %v858
    %v860 = vpop.f32.mrb[0].mxu0
    %861 = vdwg.mxu0
    %862 = vmatprep.subr.mxu0 0.0
    %863 = vmatpush1.msra.mxu0 %v681
    %864 = vmatprep.subr.mxu0 0.0
    %865 = vmatpush1.msra.mxu0 %v686
    %866 = vmatprep.subr.mxu0 0.0
    %867 = vmatpush1.msra.mxu0 %v691
    %868 = vmatprep.subr.mxu0 0.0
    %869 = vmatpush1.msra.mxu0 %v696
    %870 = vmatprep.subr.mxu0 0.0
    %871 = vmatpush1.msra.mxu0 0.0
    %872 = vmatprep.subr.mxu0 0.0
    %873 = vmatpush1.msra.mxu0 0.0
    %874 = vmatprep.subr.mxu0 0.0
    %875 = vmatpush1.msra.mxu0 0.0
    %876 = vmatprep.subr.mxu0 0.0
    %877 = vmatpush1.msra.mxu0 0.0
    %878 = vmatprep.subr.mxu0 0.0
    %879 = vmatpush1.msra.mxu0 0.0
    %880 = vmatprep.subr.mxu0 0.0
    %881 = vmatpush1.msra.mxu0 0.0
    %882 = vmatprep.subr.mxu0 0.0
    %883 = vmatpush1.msra.mxu0 0.0
    %884 = vmatprep.subr.mxu0 0.0
    %885 = vmatpush1.msra.mxu0 0.0
    %886 = vmatprep.subr.mxu0 0.0
    %887 = vmatpush1.msra.mxu0 0.0
    %888 = vmatprep.subr.mxu0 0.0
    %889 = vmatpush1.msra.mxu0 0.0
    %890 = vmatprep.subr.mxu0 0.0
    %891 = vmatpush1.msra.mxu0 0.0
    %892 = vmatprep.subr.mxu0 0.0
    %893 = vmatpush1.msra.mxu0 0.0
    %894 = vmatprep.subr.mxu0 0.0
    %895 = vmatpush1.msra.mxu0 0.0
    %896 = vmatprep.subr.mxu0 0.0
    %897 = vmatpush1.msra.mxu0 0.0
    %898 = vmatprep.subr.mxu0 0.0
    %899 = vmatpush1.msra.mxu0 0.0
    %900 = vmatprep.subr.mxu0 0.0
    %901 = vmatpush1.msra.mxu0 0.0
    %902 = vmatprep.subr.mxu0 0.0
    %903 = vmatpush1.msra.mxu0 0.0
    %904 = vmatprep.subr.mxu0 0.0
    %905 = vmatpush1.msra.mxu0 0.0
    %906 = vmatprep.subr.mxu0 0.0
    %907 = vmatpush1.msra.mxu0 0.0
    %908 = vmatprep.subr.mxu0 0.0
    %909 = vmatpush1.msra.mxu0 0.0
    %910 = vmatprep.subr.mxu0 0.0
    %911 = vmatpush1.msra.mxu0 0.0
    %912 = vmatprep.subr.mxu0 0.0
    %913 = vmatpush1.msra.mxu0 0.0
    %914 = vmatprep.subr.mxu0 0.0
    %915 = vmatpush1.msra.mxu0 0.0
    %916 = vmatprep.subr.mxu0 0.0
    %917 = vmatpush1.msra.mxu0 0.0
    %918 = vmatprep.subr.mxu0 0.0
    %919 = vmatpush1.msra.mxu0 0.0
    %920 = vmatprep.subr.mxu0 0.0
    %921 = vmatpush1.msra.mxu0 0.0
    %922 = vmatprep.subr.mxu0 0.0
    %923 = vmatpush1.msra.mxu0 0.0
    %924 = vmatprep.subr.mxu0 0.0
    %925 = vmatpush1.msra.mxu0 0.0
    %926 = vmatprep.mubr.f32.mxu0 0.0
    %927 = vmatmul.mubr.f32.gmra.mrb[0].mxu0 %v720
    %v928 = vpop.f32.mrb[0].mxu0
    %v929 = vadd.f32 0.0, %v928
    %v930 = vpop.f32.mrb[0].mxu0
    %931 = vdwg.mxu0
    %932 = vmatprep.subr.mxu0 0.0
    %933 = vmatpush1.msra.mxu0 %v701
    %934 = vmatprep.subr.mxu0 0.0
    %935 = vmatpush1.msra.mxu0 %v706
    %936 = vmatprep.subr.mxu0 0.0
    %937 = vmatpush1.msra.mxu0 %v711
    %938 = vmatprep.subr.mxu0 0.0
    %939 = vmatpush1.msra.mxu0 %v716
    %940 = vmatprep.subr.mxu0 0.0
    %941 = vmatpush1.msra.mxu0 0.0
    %942 = vmatprep.subr.mxu0 0.0
    %943 = vmatpush1.msra.mxu0 0.0
    %944 = vmatprep.subr.mxu0 0.0
    %945 = vmatpush1.msra.mxu0 0.0
    %946 = vmatprep.subr.mxu0 0.0
    %947 = vmatpush1.msra.mxu0 0.0
    %948 = vmatprep.subr.mxu0 0.0
    %949 = vmatpush1.msra.mxu0 0.0
    %950 = vmatprep.subr.mxu0 0.0
    %951 = vmatpush1.msra.mxu0 0.0
    %952 = vmatprep.subr.mxu0 0.0
    %953 = vmatpush1.msra.mxu0 0.0
    %954 = vmatprep.subr.mxu0 0.0
    %955 = vmatpush1.msra.mxu0 0.0
    %956 = vmatprep.subr.mxu0 0.0
    %957 = vmatpush1.msra.mxu0 0.0
    %958 = vmatprep.subr.mxu0 0.0
    %959 = vmatpush1.msra.mxu0 0.0
    %960 = vmatprep.subr.mxu0 0.0
    %961 = vmatpush1.msra.mxu0 0.0
    %962 = vmatprep.subr.mxu0 0.0
    %963 = vmatpush1.msra.mxu0 0.0
    %964 = vmatprep.subr.mxu0 0.0
    %965 = vmatpush1.msra.mxu0 0.0
    %966 = vmatprep.subr.mxu0 0.0
    %967 = vmatpush1.msra.mxu0 0.0
    %968 = vmatprep.subr.mxu0 0.0
    %969 = vmatpush1.msra.mxu0 0.0
    %970 = vmatprep.subr.mxu0 0.0
    %971 = vmatpush1.msra.mxu0 0.0
    %972 = vmatprep.subr.mxu0 0.0
    %973 = vmatpush1.msra.mxu0 0.0
    %974 = vmatprep.subr.mxu0 0.0
    %975 = vmatpush1.msra.mxu0 0.0
    %976 = vmatprep.subr.mxu0 0.0
    %977 = vmatpush1.msra.mxu0 0.0
    %978 = vmatprep.subr.mxu0 0.0
    %979 = vmatpush1.msra.mxu0 0.0
    %980 = vmatprep.subr.mxu0 0.0
    %981 = vmatpush1.msra.mxu0 0.0
    %982 = vmatprep.subr.mxu0 0.0
    %983 = vmatpush1.msra.mxu0 0.0
    %984 = vmatprep.subr.mxu0 0.0
    %985 = vmatpush1.msra.mxu0 0.0
    %986 = vmatprep.subr.mxu0 0.0
    %987 = vmatpush1.msra.mxu0 0.0
    %988 = vmatprep.subr.mxu0 0.0
    %989 = vmatpush1.msra.mxu0 0.0
    %990 = vmatprep.subr.mxu0 0.0
    %991 = vmatpush1.msra.mxu0 0.0
    %992 = vmatprep.subr.mxu0 0.0
    %993 = vmatpush1.msra.mxu0 0.0
    %994 = vmatprep.subr.mxu0 0.0
    %995 = vmatpush1.msra.mxu0 0.0
    %996 = vmatprep.mubr.f32.mxu0 0.0
    %997 = vmatmul.mubr.f32.gmra.mrb[0].mxu0 %v720
    %v998 = vpop.f32.mrb[0].mxu0
    %v999 = vadd.f32 0.0, %v998
    %v1000 = vpop.f32.mrb[0].mxu0
    %1001 = vdwg.mxu0
    %vm1002 = vcmask 130048
    %v1003 = vsel %vm1002, %v355, -inf
    %1004 = vmax.xlane.f32.xlu0 %v1003
    %v1005 = vpop.xlane.xlu0 %1004
    %v1006 = vsel %vm1002, %v425, -inf
    %1007 = vmax.xlane.f32.xlu0 %v1006
    %v1008 = vpop.xlane.xlu0 %1007
    %v1009 = vsel %vm1002, %v495, -inf
    %1010 = vmax.xlane.f32.xlu0 %v1009
    %v1011 = vpop.xlane.xlu0 %1010
    %v1012 = vsel %vm1002, %v565, -inf
    %1013 = vmax.xlane.f32.xlu0 %v1012
    %v1014 = vpop.xlane.xlu0 %1013
    %v1015 = vsel %vm1002, %v789, -inf
    %1016 = vmax.xlane.f32.xlu0 %v1015
    %v1017 = vpop.xlane.xlu0 %1016
    %v1018 = vsel %vm1002, %v859, -inf
    %1019 = vmax.xlane.f32.xlu0 %v1018
    %v1020 = vpop.xlane.xlu0 %1019
    %v1021 = vsel %vm1002, %v929, -inf
    %1022 = vmax.xlane.f32.xlu0 %v1021
    %v1023 = vpop.xlane.xlu0 %1022
    %v1024 = vsel %vm1002, %v999, -inf
    %1025 = vmax.xlane.f32.xlu0 %v1024
    %v1026 = vpop.xlane.xlu0 %1025
    %v1027 = vsub.f32 %v355, %v1005
    %v1028 = vsub.f32 %v425, %v1008
    %v1029 = vsub.f32 %v495, %v1011
    %v1030 = vsub.f32 %v565, %v1014
    %v1031 = vsub.f32 %v789, %v1017
    %v1032 = vsub.f32 %v859, %v1020
    %v1033 = vsub.f32 %v929, %v1023
    %v1034 = vsub.f32 %v999, %v1026
    %v1035 = vmul.f32 %v1027, 1.442695
    %v1036 = vpow.pop %v1035
    %v1037 = vmul.f32 %v1028, 1.442695
    %v1038 = vpow.pop %v1037
    %v1039 = vmul.f32 %v1029, 1.442695
    %v1040 = vpow.pop %v1039
    %v1041 = vmul.f32 %v1030, 1.442695
    %v1042 = vpow.pop %v1041
    %v1043 = vmul.f32 %v1031, 1.442695
    %v1044 = vpow.pop %v1043
    %v1045 = vmul.f32 %v1032, 1.442695
    %v1046 = vpow.pop %v1045
    %v1047 = vmul.f32 %v1033, 1.442695
    %v1048 = vpow.pop %v1047
    %v1049 = vmul.f32 %v1034, 1.442695
    %v1050 = vpow.pop %v1049
    %v1051 = vsel %vm1002, %v1036, 0.0
    %1052 = vadd.xlane.f32.xlu0 %v1051
    %v1053 = vpop.xlane.xlu0 %1052
    %v1054 = vsel %vm1002, %v1038, 0.0
    %1055 = vadd.xlane.f32.xlu0 %v1054
    %v1056 = vpop.xlane.xlu0 %1055
    %v1057 = vsel %vm1002, %v1040, 0.0
    %1058 = vadd.xlane.f32.xlu0 %v1057
    %v1059 = vpop.xlane.xlu0 %1058
    %v1060 = vsel %vm1002, %v1042, 0.0
    %1061 = vadd.xlane.f32.xlu0 %v1060
    %v1062 = vpop.xlane.xlu0 %1061
    %v1063 = vsel %vm1002, %v1044, 0.0
    %1064 = vadd.xlane.f32.xlu0 %v1063
    %v1065 = vpop.xlane.xlu0 %1064
    %v1066 = vsel %vm1002, %v1046, 0.0
    %1067 = vadd.xlane.f32.xlu0 %v1066
    %v1068 = vpop.xlane.xlu0 %1067
    %v1069 = vsel %vm1002, %v1048, 0.0
    %1070 = vadd.xlane.f32.xlu0 %v1069
    %v1071 = vpop.xlane.xlu0 %1070
    %v1072 = vsel %vm1002, %v1050, 0.0
    %1073 = vadd.xlane.f32.xlu0 %v1072
    %v1074 = vpop.xlane.xlu0 %1073
    %v1075 = vrcp.pop %v1053
    %v1076 = vrcp.pop %v1056
    %v1077 = vrcp.pop %v1059
    %v1078 = vrcp.pop %v1062
    %v1079 = vrcp.pop %v1065
    %v1080 = vrcp.pop %v1068
    %v1081 = vrcp.pop %v1071
    %v1082 = vrcp.pop %v1074
    %v1083 = vmul.f32 %v1036, %v1075
    %v1084 = vmul.f32 %v1038, %v1076
    %v1085 = vmul.f32 %v1040, %v1077
    %v1086 = vmul.f32 %v1042, %v1078
    %v1087 = vmul.f32 %v1044, %v1079
    %v1088 = vmul.f32 %v1046, %v1080
    %v1089 = vmul.f32 %v1048, %v1081
    %v1090 = vmul.f32 %v1050, %v1082
    %v1092 = vsel %vm1002, %v1083, 0
    %v1095 = vsel %vm1002, %v1084, 0
    %v1098 = vsel %vm1002, %v1085, 0
    %v1101 = vsel %vm1002, %v1086, 0
    %1103 = vmatprep.subr.mxu0 0.0
    %1104 = vmatpush1.msra.mxu0 %v24
    %1105 = vmatprep.subr.mxu0 0.0
    %1106 = vmatpush1.msra.mxu0 %v25
    %1107 = vmatprep.subr.mxu0 0.0
    %1108 = vmatpush1.msra.mxu0 0.0
    %1109 = vmatprep.subr.mxu0 0.0
    %1110 = vmatpush1.msra.mxu0 0.0
    %1111 = vmatprep.subr.mxu0 0.0
    %1112 = vmatpush1.msra.mxu0 0.0
    %1113 = vmatprep.subr.mxu0 0.0
    %1114 = vmatpush1.msra.mxu0 0.0
    %1115 = vmatprep.subr.mxu0 0.0
    %1116 = vmatpush1.msra.mxu0 0.0
    %1117 = vmatprep.subr.mxu0 0.0
    %1118 = vmatpush1.msra.mxu0 0.0
    %1119 = vmatprep.subr.mxu0 0.0
    %1120 = vmatpush1.msra.mxu0 0.0
    %1121 = vmatprep.subr.mxu0 0.0
    %1122 = vmatpush1.msra.mxu0 0.0
    %1123 = vmatprep.subr.mxu0 0.0
    %1124 = vmatpush1.msra.mxu0 0.0
    %1125 = vmatprep.subr.mxu0 0.0
    %1126 = vmatpush1.msra.mxu0 0.0
    %1127 = vmatprep.subr.mxu0 0.0
    %1128 = vmatpush1.msra.mxu0 0.0
    %1129 = vmatprep.subr.mxu0 0.0
    %1130 = vmatpush1.msra.mxu0 0.0
    %1131 = vmatprep.subr.mxu0 0.0
    %1132 = vmatpush1.msra.mxu0 0.0
    %1133 = vmatprep.subr.mxu0 0.0
    %1134 = vmatpush1.msra.mxu0 0.0
    %1135 = vmatprep.subr.mxu0 0.0
    %1136 = vmatpush1.msra.mxu0 0.0
    %1137 = vmatprep.subr.mxu0 0.0
    %1138 = vmatpush1.msra.mxu0 0.0
    %1139 = vmatprep.subr.mxu0 0.0
    %1140 = vmatpush1.msra.mxu0 0.0
    %1141 = vmatprep.subr.mxu0 0.0
    %1142 = vmatpush1.msra.mxu0 0.0
    %1143 = vmatprep.subr.mxu0 0.0
    %1144 = vmatpush1.msra.mxu0 0.0
    %1145 = vmatprep.subr.mxu0 0.0
    %1146 = vmatpush1.msra.mxu0 0.0
    %1147 = vmatprep.subr.mxu0 0.0
    %1148 = vmatpush1.msra.mxu0 0.0
    %1149 = vmatprep.subr.mxu0 0.0
    %1150 = vmatpush1.msra.mxu0 0.0
    %1151 = vmatprep.subr.mxu0 0.0
    %1152 = vmatpush1.msra.mxu0 0.0
    %1153 = vmatprep.subr.mxu0 0.0
    %1154 = vmatpush1.msra.mxu0 0.0
    %1155 = vmatprep.subr.mxu0 0.0
    %1156 = vmatpush1.msra.mxu0 0.0
    %1157 = vmatprep.subr.mxu0 0.0
    %1158 = vmatpush1.msra.mxu0 0.0
    %1159 = vmatprep.subr.mxu0 0.0
    %1160 = vmatpush1.msra.mxu0 0.0
    %1161 = vmatprep.subr.mxu0 0.0
    %1162 = vmatpush1.msra.mxu0 0.0
    %1163 = vmatprep.subr.mxu0 0.0
    %1164 = vmatpush1.msra.mxu0 0.0
    %1165 = vmatprep.subr.mxu0 0.0
    %1166 = vmatpush1.msra.mxu0 0.0
    %1167 = vmatprep.mubr.f32.mxu0 0.0
    %1168 = vmatmul.mubr.f32.gmra.mrb[0].mxu0 %v1092
    %v1169 = vpop.f32.mrb[0].mxu0
    %v1170 = vadd.f32 0.0, %v1169
    %v1171 = vpop.f32.mrb[0].mxu0
    %1172 = vmatprep.mubr.f32.mxu0 0.0
    %1173 = vmatmul.mubr.f32.gmra.mrb[0].mxu0 %v1095
    %v1174 = vpop.f32.mrb[0].mxu0
    %v1175 = vadd.f32 0.0, %v1174
    %v1176 = vpop.f32.mrb[0].mxu0
    %1177 = vmatprep.mubr.f32.mxu0 0.0
    %1178 = vmatmul.mubr.f32.gmra.mrb[0].mxu0 %v1098
    %v1179 = vpop.f32.mrb[0].mxu0
    %v1180 = vadd.f32 0.0, %v1179
    %v1181 = vpop.f32.mrb[0].mxu0
    %1182 = vmatprep.mubr.f32.mxu0 0.0
    %1183 = vmatmul.mubr.f32.gmra.mrb[0].mxu0 %v1101
    %v1184 = vpop.f32.mrb[0].mxu0
    %v1185 = vadd.f32 0.0, %v1184
    %v1186 = vpop.f32.mrb[0].mxu0
    %1187 = vdwg.mxu0
    %v1189 = vsel %vm62, %v1175, 0
    %1191 = vmatprep.subr.mxu0 0.0
    %1192 = vmatpush1.msra.mxu0 %v48
    %1193 = vmatprep.subr.mxu0 0.0
    %1194 = vmatpush1.msra.mxu0 %v49
    %1195 = vmatprep.subr.mxu0 0.0
    %1196 = vmatpush1.msra.mxu0 %v50
    %1197 = vmatprep.subr.mxu0 0.0
    %1198 = vmatpush1.msra.mxu0 %v51
    %1199 = vmatprep.subr.mxu0 0.0
    %1200 = vmatpush1.msra.mxu0 0.0
    %1201 = vmatprep.subr.mxu0 0.0
    %1202 = vmatpush1.msra.mxu0 0.0
    %1203 = vmatprep.subr.mxu0 0.0
    %1204 = vmatpush1.msra.mxu0 0.0
    %1205 = vmatprep.subr.mxu0 0.0
    %1206 = vmatpush1.msra.mxu0 0.0
    %1207 = vmatprep.subr.mxu0 0.0
    %1208 = vmatpush1.msra.mxu0 0.0
    %1209 = vmatprep.subr.mxu0 0.0
    %1210 = vmatpush1.msra.mxu0 0.0
    %1211 = vmatprep.subr.mxu0 0.0
    %1212 = vmatpush1.msra.mxu0 0.0
    %1213 = vmatprep.subr.mxu0 0.0
    %1214 = vmatpush1.msra.mxu0 0.0
    %1215 = vmatprep.subr.mxu0 0.0
    %1216 = vmatpush1.msra.mxu0 0.0
    %1217 = vmatprep.subr.mxu0 0.0
    %1218 = vmatpush1.msra.mxu0 0.0
    %1219 = vmatprep.subr.mxu0 0.0
    %1220 = vmatpush1.msra.mxu0 0.0
    %1221 = vmatprep.subr.mxu0 0.0
    %1222 = vmatpush1.msra.mxu0 0.0
    %1223 = vmatprep.subr.mxu0 0.0
    %1224 = vmatpush1.msra.mxu0 0.0
    %1225 = vmatprep.subr.mxu0 0.0
    %1226 = vmatpush1.msra.mxu0 0.0
    %1227 = vmatprep.subr.mxu0 0.0
    %1228 = vmatpush1.msra.mxu0 0.0
    %1229 = vmatprep.subr.mxu0 0.0
    %1230 = vmatpush1.msra.mxu0 0.0
    %1231 = vmatprep.subr.mxu0 0.0
    %1232 = vmatpush1.msra.mxu0 0.0
    %1233 = vmatprep.subr.mxu0 0.0
    %1234 = vmatpush1.msra.mxu0 0.0
    %1235 = vmatprep.subr.mxu0 0.0
    %1236 = vmatpush1.msra.mxu0 0.0
    %1237 = vmatprep.subr.mxu0 0.0
    %1238 = vmatpush1.msra.mxu0 0.0
    %1239 = vmatprep.subr.mxu0 0.0
    %1240 = vmatpush1.msra.mxu0 0.0
    %1241 = vmatprep.subr.mxu0 0.0
    %1242 = vmatpush1.msra.mxu0 0.0
    %1243 = vmatprep.subr.mxu0 0.0
    %1244 = vmatpush1.msra.mxu0 0.0
    %1245 = vmatprep.subr.mxu0 0.0
    %1246 = vmatpush1.msra.mxu0 0.0
    %1247 = vmatprep.subr.mxu0 0.0
    %1248 = vmatpush1.msra.mxu0 0.0
    %1249 = vmatprep.subr.mxu0 0.0
    %1250 = vmatpush1.msra.mxu0 0.0
    %1251 = vmatprep.subr.mxu0 0.0
    %1252 = vmatpush1.msra.mxu0 0.0
    %1253 = vmatprep.subr.mxu0 0.0
    %1254 = vmatpush1.msra.mxu0 0.0
    %1255 = vmatprep.mubr.f32.mxu0 0.0
    %1256 = vmatmul.mubr.f32.gmra.mrb[0].mxu0 %v1189
    %v1257 = vpop.f32.mrb[0].mxu0
    %v1258 = vadd.f32 0.0, %v1257
    %v1259 = vpop.f32.mrb[0].mxu0
    %1260 = vdwg.mxu0
    %v1262 = vsel %vm62, %v1170, 0
    %1264 = vmatprep.subr.mxu0 0.0
    %1265 = vmatpush1.msra.mxu0 %v44
    %1266 = vmatprep.subr.mxu0 0.0
    %1267 = vmatpush1.msra.mxu0 %v45
    %1268 = vmatprep.subr.mxu0 0.0
    %1269 = vmatpush1.msra.mxu0 %v46
    %1270 = vmatprep.subr.mxu0 0.0
    %1271 = vmatpush1.msra.mxu0 %v47
    %1272 = vmatprep.subr.mxu0 0.0
    %1273 = vmatpush1.msra.mxu0 0.0
    %1274 = vmatprep.subr.mxu0 0.0
    %1275 = vmatpush1.msra.mxu0 0.0
    %1276 = vmatprep.subr.mxu0 0.0
    %1277 = vmatpush1.msra.mxu0 0.0
    %1278 = vmatprep.subr.mxu0 0.0
    %1279 = vmatpush1.msra.mxu0 0.0
    %1280 = vmatprep.subr.mxu0 0.0
    %1281 = vmatpush1.msra.mxu0 0.0
    %1282 = vmatprep.subr.mxu0 0.0
    %1283 = vmatpush1.msra.mxu0 0.0
    %1284 = vmatprep.subr.mxu0 0.0
    %1285 = vmatpush1.msra.mxu0 0.0
    %1286 = vmatprep.subr.mxu0 0.0
    %1287 = vmatpush1.msra.mxu0 0.0
    %1288 = vmatprep.subr.mxu0 0.0
    %1289 = vmatpush1.msra.mxu0 0.0
    %1290 = vmatprep.subr.mxu0 0.0
    %1291 = vmatpush1.msra.mxu0 0.0
    %1292 = vmatprep.subr.mxu0 0.0
    %1293 = vmatpush1.msra.mxu0 0.0
    %1294 = vmatprep.subr.mxu0 0.0
    %1295 = vmatpush1.msra.mxu0 0.0
    %1296 = vmatprep.subr.mxu0 0.0
    %1297 = vmatpush1.msra.mxu0 0.0
    %1298 = vmatprep.subr.mxu0 0.0
    %1299 = vmatpush1.msra.mxu0 0.0
    %1300 = vmatprep.subr.mxu0 0.0
    %1301 = vmatpush1.msra.mxu0 0.0
    %1302 = vmatprep.subr.mxu0 0.0
    %1303 = vmatpush1.msra.mxu0 0.0
    %1304 = vmatprep.subr.mxu0 0.0
    %1305 = vmatpush1.msra.mxu0 0.0
    %1306 = vmatprep.subr.mxu0 0.0
    %1307 = vmatpush1.msra.mxu0 0.0
    %1308 = vmatprep.subr.mxu0 0.0
    %1309 = vmatpush1.msra.mxu0 0.0
    %1310 = vmatprep.subr.mxu0 0.0
    %1311 = vmatpush1.msra.mxu0 0.0
    %1312 = vmatprep.subr.mxu0 0.0
    %1313 = vmatpush1.msra.mxu0 0.0
    %1314 = vmatprep.subr.mxu0 0.0
    %1315 = vmatpush1.msra.mxu0 0.0
    %1316 = vmatprep.subr.mxu0 0.0
    %1317 = vmatpush1.msra.mxu0 0.0
    %1318 = vmatprep.subr.mxu0 0.0
    %1319 = vmatpush1.msra.mxu0 0.0
    %1320 = vmatprep.subr.mxu0 0.0
    %1321 = vmatpush1.msra.mxu0 0.0
    %1322 = vmatprep.subr.mxu0 0.0
    %1323 = vmatpush1.msra.mxu0 0.0
    %1324 = vmatprep.subr.mxu0 0.0
    %1325 = vmatpush1.msra.mxu0 0.0
    %1326 = vmatprep.subr.mxu0 0.0
    %1327 = vmatpush1.msra.mxu0 0.0
    %1328 = vmatprep.mubr.f32.mxu0 0.0
    %1329 = vmatmul.mubr.f32.gmra.mrb[0].mxu0 %v1262
    %v1330 = vpop.f32.mrb[0].mxu0
    %v1331 = vadd.f32 %v1258, %v1330
    %v1332 = vpop.f32.mrb[0].mxu0
    %1333 = vdwg.mxu0
    %v1335 = vsel %vm62, %v1180, 0
    %1337 = vmatprep.subr.mxu0 0.0
    %1338 = vmatpush1.msra.mxu0 %v52
    %1339 = vmatprep.subr.mxu0 0.0
    %1340 = vmatpush1.msra.mxu0 %v53
    %1341 = vmatprep.subr.mxu0 0.0
    %1342 = vmatpush1.msra.mxu0 %v54
    %1343 = vmatprep.subr.mxu0 0.0
    %1344 = vmatpush1.msra.mxu0 %v55
    %1345 = vmatprep.subr.mxu0 0.0
    %1346 = vmatpush1.msra.mxu0 0.0
    %1347 = vmatprep.subr.mxu0 0.0
    %1348 = vmatpush1.msra.mxu0 0.0
    %1349 = vmatprep.subr.mxu0 0.0
    %1350 = vmatpush1.msra.mxu0 0.0
    %1351 = vmatprep.subr.mxu0 0.0
    %1352 = vmatpush1.msra.mxu0 0.0
    %1353 = vmatprep.subr.mxu0 0.0
    %1354 = vmatpush1.msra.mxu0 0.0
    %1355 = vmatprep.subr.mxu0 0.0
    %1356 = vmatpush1.msra.mxu0 0.0
    %1357 = vmatprep.subr.mxu0 0.0
    %1358 = vmatpush1.msra.mxu0 0.0
    %1359 = vmatprep.subr.mxu0 0.0
    %1360 = vmatpush1.msra.mxu0 0.0
    %1361 = vmatprep.subr.mxu0 0.0
    %1362 = vmatpush1.msra.mxu0 0.0
    %1363 = vmatprep.subr.mxu0 0.0
    %1364 = vmatpush1.msra.mxu0 0.0
    %1365 = vmatprep.subr.mxu0 0.0
    %1366 = vmatpush1.msra.mxu0 0.0
    %1367 = vmatprep.subr.mxu0 0.0
    %1368 = vmatpush1.msra.mxu0 0.0
    %1369 = vmatprep.subr.mxu0 0.0
    %1370 = vmatpush1.msra.mxu0 0.0
    %1371 = vmatprep.subr.mxu0 0.0
    %1372 = vmatpush1.msra.mxu0 0.0
    %1373 = vmatprep.subr.mxu0 0.0
    %1374 = vmatpush1.msra.mxu0 0.0
    %1375 = vmatprep.subr.mxu0 0.0
    %1376 = vmatpush1.msra.mxu0 0.0
    %1377 = vmatprep.subr.mxu0 0.0
    %1378 = vmatpush1.msra.mxu0 0.0
    %1379 = vmatprep.subr.mxu0 0.0
    %1380 = vmatpush1.msra.mxu0 0.0
    %1381 = vmatprep.subr.mxu0 0.0
    %1382 = vmatpush1.msra.mxu0 0.0
    %1383 = vmatprep.subr.mxu0 0.0
    %1384 = vmatpush1.msra.mxu0 0.0
    %1385 = vmatprep.subr.mxu0 0.0
    %1386 = vmatpush1.msra.mxu0 0.0
    %1387 = vmatprep.subr.mxu0 0.0
    %1388 = vmatpush1.msra.mxu0 0.0
    %1389 = vmatprep.subr.mxu0 0.0
    %1390 = vmatpush1.msra.mxu0 0.0
    %1391 = vmatprep.subr.mxu0 0.0
    %1392 = vmatpush1.msra.mxu0 0.0
    %1393 = vmatprep.subr.mxu0 0.0
    %1394 = vmatpush1.msra.mxu0 0.0
    %1395 = vmatprep.subr.mxu0 0.0
    %1396 = vmatpush1.msra.mxu0 0.0
    %1397 = vmatprep.subr.mxu0 0.0
    %1398 = vmatpush1.msra.mxu0 0.0
    %1399 = vmatprep.subr.mxu0 0.0
    %1400 = vmatpush1.msra.mxu0 0.0
    %1401 = vmatprep.mubr.f32.mxu0 0.0
    %1402 = vmatmul.mubr.f32.gmra.mrb[0].mxu0 %v1335
    %v1403 = vpop.f32.mrb[0].mxu0
    %v1404 = vadd.f32 0.0, %v1403
    %v1405 = vpop.f32.mrb[0].mxu0
    %1406 = vdwg.mxu0
    %v1407 = vadd.f32 %v1331, %v1404
    %v1409 = vsel %vm62, %v1185, 0
    %1411 = vmatprep.subr.mxu0 0.0
    %1412 = vmatpush1.msra.mxu0 %v56
    %1413 = vmatprep.subr.mxu0 0.0
    %1414 = vmatpush1.msra.mxu0 %v57
    %1415 = vmatprep.subr.mxu0 0.0
    %1416 = vmatpush1.msra.mxu0 %v58
    %1417 = vmatprep.subr.mxu0 0.0
    %1418 = vmatpush1.msra.mxu0 %v59
    %1419 = vmatprep.subr.mxu0 0.0
    %1420 = vmatpush1.msra.mxu0 0.0
    %1421 = vmatprep.subr.mxu0 0.0
    %1422 = vmatpush1.msra.mxu0 0.0
    %1423 = vmatprep.subr.mxu0 0.0
    %1424 = vmatpush1.msra.mxu0 0.0
    %1425 = vmatprep.subr.mxu0 0.0
    %1426 = vmatpush1.msra.mxu0 0.0
    %1427 = vmatprep.subr.mxu0 0.0
    %1428 = vmatpush1.msra.mxu0 0.0
    %1429 = vmatprep.subr.mxu0 0.0
    %1430 = vmatpush1.msra.mxu0 0.0
    %1431 = vmatprep.subr.mxu0 0.0
    %1432 = vmatpush1.msra.mxu0 0.0
    %1433 = vmatprep.subr.mxu0 0.0
    %1434 = vmatpush1.msra.mxu0 0.0
    %1435 = vmatprep.subr.mxu0 0.0
    %1436 = vmatpush1.msra.mxu0 0.0
    %1437 = vmatprep.subr.mxu0 0.0
    %1438 = vmatpush1.msra.mxu0 0.0
    %1439 = vmatprep.subr.mxu0 0.0
    %1440 = vmatpush1.msra.mxu0 0.0
    %1441 = vmatprep.subr.mxu0 0.0
    %1442 = vmatpush1.msra.mxu0 0.0
    %1443 = vmatprep.subr.mxu0 0.0
    %1444 = vmatpush1.msra.mxu0 0.0
    %1445 = vmatprep.subr.mxu0 0.0
    %1446 = vmatpush1.msra.mxu0 0.0
    %1447 = vmatprep.subr.mxu0 0.0
    %1448 = vmatpush1.msra.mxu0 0.0
    %1449 = vmatprep.subr.mxu0 0.0
    %1450 = vmatpush1.msra.mxu0 0.0
    %1451 = vmatprep.subr.mxu0 0.0
    %1452 = vmatpush1.msra.mxu0 0.0
    %1453 = vmatprep.subr.mxu0 0.0
    %1454 = vmatpush1.msra.mxu0 0.0
    %1455 = vmatprep.subr.mxu0 0.0
    %1456 = vmatpush1.msra.mxu0 0.0
    %1457 = vmatprep.subr.mxu0 0.0
    %1458 = vmatpush1.msra.mxu0 0.0
    %1459 = vmatprep.subr.mxu0 0.0
    %1460 = vmatpush1.msra.mxu0 0.0
    %1461 = vmatprep.subr.mxu0 0.0
    %1462 = vmatpush1.msra.mxu0 0.0
    %1463 = vmatprep.subr.mxu0 0.0
    %1464 = vmatpush1.msra.mxu0 0.0
    %1465 = vmatprep.subr.mxu0 0.0
    %1466 = vmatpush1.msra.mxu0 0.0
    %1467 = vmatprep.subr.mxu0 0.0
    %1468 = vmatpush1.msra.mxu0 0.0
    %1469 = vmatprep.subr.mxu0 0.0
    %1470 = vmatpush1.msra.mxu0 0.0
    %1471 = vmatprep.subr.mxu0 0.0
    %1472 = vmatpush1.msra.mxu0 0.0
    %1473 = vmatprep.subr.mxu0 0.0
    %1474 = vmatpush1.msra.mxu0 0.0
    %1475 = vmatprep.mubr.f32.mxu0 0.0
    %1476 = vmatmul.mubr.f32.gmra.mrb[0].mxu0 %v1409
    %v1477 = vpop.f32.mrb[0].mxu0
    %v1478 = vadd.f32 0.0, %v1477
    %v1479 = vpop.f32.mrb[0].mxu0
    %1480 = vdwg.mxu0
    %v1481 = vadd.f32 %v1407, %v1478
    %v1483 = vsel %vm1002, %v1087, 0
    %v1486 = vsel %vm1002, %v1088, 0
    %v1489 = vsel %vm1002, %v1089, 0
    %v1492 = vsel %vm1002, %v1090, 0
    %1494 = vmatprep.subr.mxu0 0.0
    %1495 = vmatpush1.msra.mxu0 %v26
    %1496 = vmatprep.subr.mxu0 0.0
    %1497 = vmatpush1.msra.mxu0 %v27
    %1498 = vmatprep.subr.mxu0 0.0
    %1499 = vmatpush1.msra.mxu0 0.0
    %1500 = vmatprep.subr.mxu0 0.0
    %1501 = vmatpush1.msra.mxu0 0.0
    %1502 = vmatprep.subr.mxu0 0.0
    %1503 = vmatpush1.msra.mxu0 0.0
    %1504 = vmatprep.subr.mxu0 0.0
    %1505 = vmatpush1.msra.mxu0 0.0
    %1506 = vmatprep.subr.mxu0 0.0
    %1507 = vmatpush1.msra.mxu0 0.0
    %1508 = vmatprep.subr.mxu0 0.0
    %1509 = vmatpush1.msra.mxu0 0.0
    %1510 = vmatprep.subr.mxu0 0.0
    %1511 = vmatpush1.msra.mxu0 0.0
    %1512 = vmatprep.subr.mxu0 0.0
    %1513 = vmatpush1.msra.mxu0 0.0
    %1514 = vmatprep.subr.mxu0 0.0
    %1515 = vmatpush1.msra.mxu0 0.0
    %1516 = vmatprep.subr.mxu0 0.0
    %1517 = vmatpush1.msra.mxu0 0.0
    %1518 = vmatprep.subr.mxu0 0.0
    %1519 = vmatpush1.msra.mxu0 0.0
    %1520 = vmatprep.subr.mxu0 0.0
    %1521 = vmatpush1.msra.mxu0 0.0
    %1522 = vmatprep.subr.mxu0 0.0
    %1523 = vmatpush1.msra.mxu0 0.0
    %1524 = vmatprep.subr.mxu0 0.0
    %1525 = vmatpush1.msra.mxu0 0.0
    %1526 = vmatprep.subr.mxu0 0.0
    %1527 = vmatpush1.msra.mxu0 0.0
    %1528 = vmatprep.subr.mxu0 0.0
    %1529 = vmatpush1.msra.mxu0 0.0
    %1530 = vmatprep.subr.mxu0 0.0
    %1531 = vmatpush1.msra.mxu0 0.0
    %1532 = vmatprep.subr.mxu0 0.0
    %1533 = vmatpush1.msra.mxu0 0.0
    %1534 = vmatprep.subr.mxu0 0.0
    %1535 = vmatpush1.msra.mxu0 0.0
    %1536 = vmatprep.subr.mxu0 0.0
    %1537 = vmatpush1.msra.mxu0 0.0
    %1538 = vmatprep.subr.mxu0 0.0
    %1539 = vmatpush1.msra.mxu0 0.0
    %1540 = vmatprep.subr.mxu0 0.0
    %1541 = vmatpush1.msra.mxu0 0.0
    %1542 = vmatprep.subr.mxu0 0.0
    %1543 = vmatpush1.msra.mxu0 0.0
    %1544 = vmatprep.subr.mxu0 0.0
    %1545 = vmatpush1.msra.mxu0 0.0
    %1546 = vmatprep.subr.mxu0 0.0
    %1547 = vmatpush1.msra.mxu0 0.0
    %1548 = vmatprep.subr.mxu0 0.0
    %1549 = vmatpush1.msra.mxu0 0.0
    %1550 = vmatprep.subr.mxu0 0.0
    %1551 = vmatpush1.msra.mxu0 0.0
    %1552 = vmatprep.subr.mxu0 0.0
    %1553 = vmatpush1.msra.mxu0 0.0
    %1554 = vmatprep.subr.mxu0 0.0
    %1555 = vmatpush1.msra.mxu0 0.0
    %1556 = vmatprep.subr.mxu0 0.0
    %1557 = vmatpush1.msra.mxu0 0.0
    %1558 = vmatprep.mubr.f32.mxu0 0.0
    %1559 = vmatmul.mubr.f32.gmra.mrb[0].mxu0 %v1483
    %v1560 = vpop.f32.mrb[0].mxu0
    %v1561 = vadd.f32 0.0, %v1560
    %v1562 = vpop.f32.mrb[0].mxu0
    %1563 = vmatprep.mubr.f32.mxu0 0.0
    %1564 = vmatmul.mubr.f32.gmra.mrb[0].mxu0 %v1486
    %v1565 = vpop.f32.mrb[0].mxu0
    %v1566 = vadd.f32 0.0, %v1565
    %v1567 = vpop.f32.mrb[0].mxu0
    %1568 = vmatprep.mubr.f32.mxu0 0.0
    %1569 = vmatmul.mubr.f32.gmra.mrb[0].mxu0 %v1489
    %v1570 = vpop.f32.mrb[0].mxu0
    %v1571 = vadd.f32 0.0, %v1570
    %v1572 = vpop.f32.mrb[0].mxu0
    %1573 = vmatprep.mubr.f32.mxu0 0.0
    %1574 = vmatmul.mubr.f32.gmra.mrb[0].mxu0 %v1492
    %v1575 = vpop.f32.mrb[0].mxu0
    %v1576 = vadd.f32 0.0, %v1575
    %v1577 = vpop.f32.mrb[0].mxu0
    %1578 = vdwg.mxu0
    %v1580 = vsel %vm62, %v1566, 0
    %1582 = vmatprep.subr.mxu0 0.0
    %1583 = vmatpush1.msra.mxu0 %v48
    %1584 = vmatprep.subr.mxu0 0.0
    %1585 = vmatpush1.msra.mxu0 %v49
    %1586 = vmatprep.subr.mxu0 0.0
    %1587 = vmatpush1.msra.mxu0 %v50
    %1588 = vmatprep.subr.mxu0 0.0
    %1589 = vmatpush1.msra.mxu0 %v51
    %1590 = vmatprep.subr.mxu0 0.0
    %1591 = vmatpush1.msra.mxu0 0.0
    %1592 = vmatprep.subr.mxu0 0.0
    %1593 = vmatpush1.msra.mxu0 0.0
    %1594 = vmatprep.subr.mxu0 0.0
    %1595 = vmatpush1.msra.mxu0 0.0
    %1596 = vmatprep.subr.mxu0 0.0
    %1597 = vmatpush1.msra.mxu0 0.0
    %1598 = vmatprep.subr.mxu0 0.0
    %1599 = vmatpush1.msra.mxu0 0.0
    %1600 = vmatprep.subr.mxu0 0.0
    %1601 = vmatpush1.msra.mxu0 0.0
    %1602 = vmatprep.subr.mxu0 0.0
    %1603 = vmatpush1.msra.mxu0 0.0
    %1604 = vmatprep.subr.mxu0 0.0
    %1605 = vmatpush1.msra.mxu0 0.0
    %1606 = vmatprep.subr.mxu0 0.0
    %1607 = vmatpush1.msra.mxu0 0.0
    %1608 = vmatprep.subr.mxu0 0.0
    %1609 = vmatpush1.msra.mxu0 0.0
    %1610 = vmatprep.subr.mxu0 0.0
    %1611 = vmatpush1.msra.mxu0 0.0
    %1612 = vmatprep.subr.mxu0 0.0
    %1613 = vmatpush1.msra.mxu0 0.0
    %1614 = vmatprep.subr.mxu0 0.0
    %1615 = vmatpush1.msra.mxu0 0.0
    %1616 = vmatprep.subr.mxu0 0.0
    %1617 = vmatpush1.msra.mxu0 0.0
    %1618 = vmatprep.subr.mxu0 0.0
    %1619 = vmatpush1.msra.mxu0 0.0
    %1620 = vmatprep.subr.mxu0 0.0
    %1621 = vmatpush1.msra.mxu0 0.0
    %1622 = vmatprep.subr.mxu0 0.0
    %1623 = vmatpush1.msra.mxu0 0.0
    %1624 = vmatprep.subr.mxu0 0.0
    %1625 = vmatpush1.msra.mxu0 0.0
    %1626 = vmatprep.subr.mxu0 0.0
    %1627 = vmatpush1.msra.mxu0 0.0
    %1628 = vmatprep.subr.mxu0 0.0
    %1629 = vmatpush1.msra.mxu0 0.0
    %1630 = vmatprep.subr.mxu0 0.0
    %1631 = vmatpush1.msra.mxu0 0.0
    %1632 = vmatprep.subr.mxu0 0.0
    %1633 = vmatpush1.msra.mxu0 0.0
    %1634 = vmatprep.subr.mxu0 0.0
    %1635 = vmatpush1.msra.mxu0 0.0
    %1636 = vmatprep.subr.mxu0 0.0
    %1637 = vmatpush1.msra.mxu0 0.0
    %1638 = vmatprep.subr.mxu0 0.0
    %1639 = vmatpush1.msra.mxu0 0.0
    %1640 = vmatprep.subr.mxu0 0.0
    %1641 = vmatpush1.msra.mxu0 0.0
    %1642 = vmatprep.subr.mxu0 0.0
    %1643 = vmatpush1.msra.mxu0 0.0
    %1644 = vmatprep.subr.mxu0 0.0
    %1645 = vmatpush1.msra.mxu0 0.0
    %1646 = vmatprep.mubr.f32.mxu0 0.0
    %1647 = vmatmul.mubr.f32.gmra.mrb[0].mxu0 %v1580
    %v1648 = vpop.f32.mrb[0].mxu0
    %v1649 = vadd.f32 0.0, %v1648
    %v1650 = vpop.f32.mrb[0].mxu0
    %1651 = vdwg.mxu0
    %v1653 = vsel %vm62, %v1561, 0
    %1655 = vmatprep.subr.mxu0 0.0
    %1656 = vmatpush1.msra.mxu0 %v44
    %1657 = vmatprep.subr.mxu0 0.0
    %1658 = vmatpush1.msra.mxu0 %v45
    %1659 = vmatprep.subr.mxu0 0.0
    %1660 = vmatpush1.msra.mxu0 %v46
    %1661 = vmatprep.subr.mxu0 0.0
    %1662 = vmatpush1.msra.mxu0 %v47
    %1663 = vmatprep.subr.mxu0 0.0
    %1664 = vmatpush1.msra.mxu0 0.0
    %1665 = vmatprep.subr.mxu0 0.0
    %1666 = vmatpush1.msra.mxu0 0.0
    %1667 = vmatprep.subr.mxu0 0.0
    %1668 = vmatpush1.msra.mxu0 0.0
    %1669 = vmatprep.subr.mxu0 0.0
    %1670 = vmatpush1.msra.mxu0 0.0
    %1671 = vmatprep.subr.mxu0 0.0
    %1672 = vmatpush1.msra.mxu0 0.0
    %1673 = vmatprep.subr.mxu0 0.0
    %1674 = vmatpush1.msra.mxu0 0.0
    %1675 = vmatprep.subr.mxu0 0.0
    %1676 = vmatpush1.msra.mxu0 0.0
    %1677 = vmatprep.subr.mxu0 0.0
    %1678 = vmatpush1.msra.mxu0 0.0
    %1679 = vmatprep.subr.mxu0 0.0
    %1680 = vmatpush1.msra.mxu0 0.0
    %1681 = vmatprep.subr.mxu0 0.0
    %1682 = vmatpush1.msra.mxu0 0.0
    %1683 = vmatprep.subr.mxu0 0.0
    %1684 = vmatpush1.msra.mxu0 0.0
    %1685 = vmatprep.subr.mxu0 0.0
    %1686 = vmatpush1.msra.mxu0 0.0
    %1687 = vmatprep.subr.mxu0 0.0
    %1688 = vmatpush1.msra.mxu0 0.0
    %1689 = vmatprep.subr.mxu0 0.0
    %1690 = vmatpush1.msra.mxu0 0.0
    %1691 = vmatprep.subr.mxu0 0.0
    %1692 = vmatpush1.msra.mxu0 0.0
    %1693 = vmatprep.subr.mxu0 0.0
    %1694 = vmatpush1.msra.mxu0 0.0
    %1695 = vmatprep.subr.mxu0 0.0
    %1696 = vmatpush1.msra.mxu0 0.0
    %1697 = vmatprep.subr.mxu0 0.0
    %1698 = vmatpush1.msra.mxu0 0.0
    %1699 = vmatprep.subr.mxu0 0.0
    %1700 = vmatpush1.msra.mxu0 0.0
    %1701 = vmatprep.subr.mxu0 0.0
    %1702 = vmatpush1.msra.mxu0 0.0
    %1703 = vmatprep.subr.mxu0 0.0
    %1704 = vmatpush1.msra.mxu0 0.0
    %1705 = vmatprep.subr.mxu0 0.0
    %1706 = vmatpush1.msra.mxu0 0.0
    %1707 = vmatprep.subr.mxu0 0.0
    %1708 = vmatpush1.msra.mxu0 0.0
    %1709 = vmatprep.subr.mxu0 0.0
    %1710 = vmatpush1.msra.mxu0 0.0
    %1711 = vmatprep.subr.mxu0 0.0
    %1712 = vmatpush1.msra.mxu0 0.0
    %1713 = vmatprep.subr.mxu0 0.0
    %1714 = vmatpush1.msra.mxu0 0.0
    %1715 = vmatprep.subr.mxu0 0.0
    %1716 = vmatpush1.msra.mxu0 0.0
    %1717 = vmatprep.subr.mxu0 0.0
    %1718 = vmatpush1.msra.mxu0 0.0
    %1719 = vmatprep.mubr.f32.mxu0 0.0
    %1720 = vmatmul.mubr.f32.gmra.mrb[0].mxu0 %v1653
    %v1721 = vpop.f32.mrb[0].mxu0
    %v1722 = vadd.f32 %v1649, %v1721
    %v1723 = vpop.f32.mrb[0].mxu0
    %1724 = vdwg.mxu0
    %v1726 = vsel %vm62, %v1571, 0
    %1728 = vmatprep.subr.mxu0 0.0
    %1729 = vmatpush1.msra.mxu0 %v52
    %1730 = vmatprep.subr.mxu0 0.0
    %1731 = vmatpush1.msra.mxu0 %v53
    %1732 = vmatprep.subr.mxu0 0.0
    %1733 = vmatpush1.msra.mxu0 %v54
    %1734 = vmatprep.subr.mxu0 0.0
    %1735 = vmatpush1.msra.mxu0 %v55
    %1736 = vmatprep.subr.mxu0 0.0
    %1737 = vmatpush1.msra.mxu0 0.0
    %1738 = vmatprep.subr.mxu0 0.0
    %1739 = vmatpush1.msra.mxu0 0.0
    %1740 = vmatprep.subr.mxu0 0.0
    %1741 = vmatpush1.msra.mxu0 0.0
    %1742 = vmatprep.subr.mxu0 0.0
    %1743 = vmatpush1.msra.mxu0 0.0
    %1744 = vmatprep.subr.mxu0 0.0
    %1745 = vmatpush1.msra.mxu0 0.0
    %1746 = vmatprep.subr.mxu0 0.0
    %1747 = vmatpush1.msra.mxu0 0.0
    %1748 = vmatprep.subr.mxu0 0.0
    %1749 = vmatpush1.msra.mxu0 0.0
    %1750 = vmatprep.subr.mxu0 0.0
    %1751 = vmatpush1.msra.mxu0 0.0
    %1752 = vmatprep.subr.mxu0 0.0
    %1753 = vmatpush1.msra.mxu0 0.0
    %1754 = vmatprep.subr.mxu0 0.0
    %1755 = vmatpush1.msra.mxu0 0.0
    %1756 = vmatprep.subr.mxu0 0.0
    %1757 = vmatpush1.msra.mxu0 0.0
    %1758 = vmatprep.subr.mxu0 0.0
    %1759 = vmatpush1.msra.mxu0 0.0
    %1760 = vmatprep.subr.mxu0 0.0
    %1761 = vmatpush1.msra.mxu0 0.0
    %1762 = vmatprep.subr.mxu0 0.0
    %1763 = vmatpush1.msra.mxu0 0.0
    %1764 = vmatprep.subr.mxu0 0.0
    %1765 = vmatpush1.msra.mxu0 0.0
    %1766 = vmatprep.subr.mxu0 0.0
    %1767 = vmatpush1.msra.mxu0 0.0
    %1768 = vmatprep.subr.mxu0 0.0
    %1769 = vmatpush1.msra.mxu0 0.0
    %1770 = vmatprep.subr.mxu0 0.0
    %1771 = vmatpush1.msra.mxu0 0.0
    %1772 = vmatprep.subr.mxu0 0.0
    %1773 = vmatpush1.msra.mxu0 0.0
    %1774 = vmatprep.subr.mxu0 0.0
    %1775 = vmatpush1.msra.mxu0 0.0
    %1776 = vmatprep.subr.mxu0 0.0
    %1777 = vmatpush1.msra.mxu0 0.0
    %1778 = vmatprep.subr.mxu0 0.0
    %1779 = vmatpush1.msra.mxu0 0.0
    %1780 = vmatprep.subr.mxu0 0.0
    %1781 = vmatpush1.msra.mxu0 0.0
    %1782 = vmatprep.subr.mxu0 0.0
    %1783 = vmatpush1.msra.mxu0 0.0
    %1784 = vmatprep.subr.mxu0 0.0
    %1785 = vmatpush1.msra.mxu0 0.0
    %1786 = vmatprep.subr.mxu0 0.0
    %1787 = vmatpush1.msra.mxu0 0.0
    %1788 = vmatprep.subr.mxu0 0.0
    %1789 = vmatpush1.msra.mxu0 0.0
    %1790 = vmatprep.subr.mxu0 0.0
    %1791 = vmatpush1.msra.mxu0 0.0
    %1792 = vmatprep.mubr.f32.mxu0 0.0
    %1793 = vmatmul.mubr.f32.gmra.mrb[0].mxu0 %v1726
    %v1794 = vpop.f32.mrb[0].mxu0
    %v1795 = vadd.f32 0.0, %v1794
    %v1796 = vpop.f32.mrb[0].mxu0
    %1797 = vdwg.mxu0
    %v1798 = vadd.f32 %v1722, %v1795
    %v1800 = vsel %vm62, %v1576, 0
    %1802 = vmatprep.subr.mxu0 0.0
    %1803 = vmatpush1.msra.mxu0 %v56
    %1804 = vmatprep.subr.mxu0 0.0
    %1805 = vmatpush1.msra.mxu0 %v57
    %1806 = vmatprep.subr.mxu0 0.0
    %1807 = vmatpush1.msra.mxu0 %v58
    %1808 = vmatprep.subr.mxu0 0.0
    %1809 = vmatpush1.msra.mxu0 %v59
    %1810 = vmatprep.subr.mxu0 0.0
    %1811 = vmatpush1.msra.mxu0 0.0
    %1812 = vmatprep.subr.mxu0 0.0
    %1813 = vmatpush1.msra.mxu0 0.0
    %1814 = vmatprep.subr.mxu0 0.0
    %1815 = vmatpush1.msra.mxu0 0.0
    %1816 = vmatprep.subr.mxu0 0.0
    %1817 = vmatpush1.msra.mxu0 0.0
    %1818 = vmatprep.subr.mxu0 0.0
    %1819 = vmatpush1.msra.mxu0 0.0
    %1820 = vmatprep.subr.mxu0 0.0
    %1821 = vmatpush1.msra.mxu0 0.0
    %1822 = vmatprep.subr.mxu0 0.0
    %1823 = vmatpush1.msra.mxu0 0.0
    %1824 = vmatprep.subr.mxu0 0.0
    %1825 = vmatpush1.msra.mxu0 0.0
    %1826 = vmatprep.subr.mxu0 0.0
    %1827 = vmatpush1.msra.mxu0 0.0
    %1828 = vmatprep.subr.mxu0 0.0
    %1829 = vmatpush1.msra.mxu0 0.0
    %1830 = vmatprep.subr.mxu0 0.0
    %1831 = vmatpush1.msra.mxu0 0.0
    %1832 = vmatprep.subr.mxu0 0.0
    %1833 = vmatpush1.msra.mxu0 0.0
    %1834 = vmatprep.subr.mxu0 0.0
    %1835 = vmatpush1.msra.mxu0 0.0
    %1836 = vmatprep.subr.mxu0 0.0
    %1837 = vmatpush1.msra.mxu0 0.0
    %1838 = vmatprep.subr.mxu0 0.0
    %1839 = vmatpush1.msra.mxu0 0.0
    %1840 = vmatprep.subr.mxu0 0.0
    %1841 = vmatpush1.msra.mxu0 0.0
    %1842 = vmatprep.subr.mxu0 0.0
    %1843 = vmatpush1.msra.mxu0 0.0
    %1844 = vmatprep.subr.mxu0 0.0
    %1845 = vmatpush1.msra.mxu0 0.0
    %1846 = vmatprep.subr.mxu0 0.0
    %1847 = vmatpush1.msra.mxu0 0.0
    %1848 = vmatprep.subr.mxu0 0.0
    %1849 = vmatpush1.msra.mxu0 0.0
    %1850 = vmatprep.subr.mxu0 0.0
    %1851 = vmatpush1.msra.mxu0 0.0
    %1852 = vmatprep.subr.mxu0 0.0
    %1853 = vmatpush1.msra.mxu0 0.0
    %1854 = vmatprep.subr.mxu0 0.0
    %1855 = vmatpush1.msra.mxu0 0.0
    %1856 = vmatprep.subr.mxu0 0.0
    %1857 = vmatpush1.msra.mxu0 0.0
    %1858 = vmatprep.subr.mxu0 0.0
    %1859 = vmatpush1.msra.mxu0 0.0
    %1860 = vmatprep.subr.mxu0 0.0
    %1861 = vmatpush1.msra.mxu0 0.0
    %1862 = vmatprep.subr.mxu0 0.0
    %1863 = vmatpush1.msra.mxu0 0.0
    %1864 = vmatprep.subr.mxu0 0.0
    %1865 = vmatpush1.msra.mxu0 0.0
    %1866 = vmatprep.mubr.f32.mxu0 0.0
    %1867 = vmatmul.mubr.f32.gmra.mrb[0].mxu0 %v1800
    %v1868 = vpop.f32.mrb[0].mxu0
    %v1869 = vadd.f32 0.0, %v1868
    %v1870 = vpop.f32.mrb[0].mxu0
    %1871 = vdwg.mxu0
    %v1872 = vadd.f32 %v1798, %v1869
    %v1873 = vadd.f32 %v22, %v1481
    %v1874 = vadd.f32 %v23, %v1872
    %1875 = vst.msk [vmem:[#allocation2] sm:$0xff] %vm62, %v1873
    %1876 = vst.msk [vmem:[#allocation2 + $0x8] sm:$0xff] %vm62, %v1874
    // Predicated region
    $region22: #{tpu_custom_call.1} parent=1 // pred_check
      _
    $region23: #{tpu_custom_call.1} parent=1 // pred_check_branch
      %1878 = sbr.rel (0) target = $region25
    $region24: #{tpu_custom_call.1} parent=1 // pred_region
      %s1880 = ssub.s32 256, 256
      %1881 = vsyncadd [#allocation3], %s1880
      %s1882 = sshll.u32 [#allocation2], 4
      %s1883 = int_to_ptr.vmem [resolvable:$true] %s1882
      %1888 = dma.vmem_to_hbm [thread:$0]  %s1883, 256, %s5, [#allocation3], 128, 128, 8
    $region25: #{tpu_custom_call.1} parent=1 // pred_fallthru
      _
    // Predicated region
    $region26: #{tpu_custom_call.1} parent=1 // pred_check
      _
    $region27: #{tpu_custom_call.1} parent=1 // pred_check_branch
      %1890 = sbr.rel (0) target = $region29
    $region28: #{tpu_custom_call.1} parent=1 // pred_region
      %1891 = dma.done [#allocation3], 256
    $region29: #{tpu_custom_call.1} parent=1 // pred_fallthru
      _
    %1892 = vsyncpa [#allocation3], 1

</llo_original>
